<compile_context>
chip_gen: v6e
topology: v6e:2x2x1
jax: 0.10.0
libtpu: 0.0.40
codegen_flags: <defaults>
</compile_context>

<pallas_src>
import functools

import jax
import jax.numpy as jnp
from jax import lax
from jax.experimental import pallas as pl
from jax.experimental.pallas import tpu as pltpu

K = 7        # spatial conv kernel size
PAD = 3      # spatial conv padding
CHUNK = 8    # channel chunk = one sublane group


# --------------------------------- Fused CBAM kernel ---------------------------------
def cbam_kernel(x_ref, fc1t_ref, fc2_ref, wrows_ref, maskj_ref, maski_ref, conv_b_ref,
                o_ref, ca_ref, am_ref, taps_ref, *, width, hw, n_chan, hidden, bt):
    # x_ref:     (Bt, C, HW) lane-dense input block
    # fc1t_ref:  (C, hid) == fc1.weight.T      fc2_ref: (C, hid) == fc2.weight
    # wrows_ref: (K, 16) with wrows[i, 2*j + m] = conv.weight[0, m, i, j]; cols 14,15 = 0
    # maskj_ref / maski_ref: (K, HW) 0/1 column / row validity masks
    # conv_b_ref: SMEM (1,) conv bias
    # ca_ref:    VMEM (C, 1)   per-channel sigmoid gates (scratch)
    # am_ref:    VMEM (8, HW)  rows 0/1 = channel-avg / channel-max maps (scratch)
    # taps_ref:  VMEM (16, HW) horizontal-tap stack; rows 14/15 stay zero (scratch)
    n_chunks = n_chan // CHUNK
    unroll = n_chunks if n_chunks <= 16 else 8
    inv_hw = jnp.float32(1.0 / hw)
    inv_c = jnp.float32(1.0 / n_chan)

    # Zero the padding rows once per grid step.  Rows 14/15 of the tap stack have zero
    # conv weights, but 0 * uninitialized-NaN would still poison the MXU accumulation.
    taps_ref[pl.ds(2 * K, 16 - 2 * K), :] = jnp.zeros((16 - 2 * K, hw), jnp.float32)
    am_ref[pl.ds(2, CHUNK - 2), :] = jnp.zeros((CHUNK - 2, hw), jnp.float32)

    for b in range(bt):                                  # static unroll over folded batch
        # ---------------- channel attention: avg-pool -> fc1 -> relu -> fc2 -> sigmoid ----
        def fc1_body(ci, h_acc):
            c0 = pl.multiple_of(ci * CHUNK, CHUNK)
            xc = x_ref[b, pl.ds(c0, CHUNK), :].astype(jnp.float32)      # (8, HW)
            y = jnp.sum(xc, axis=1, keepdims=True) * inv_hw             # (8, 1) avg pool
            return h_acc + jnp.sum(fc1t_ref[pl.ds(c0, CHUNK), :] * y,
                                   axis=0, keepdims=True)               # (1, hid)

        h = lax.fori_loop(0, n_chunks, fc1_body,
                          jnp.zeros((1, hidden), jnp.float32), unroll=unroll)
        h = jnp.maximum(h, 0.0)                                         # ReLU

        def fc2_body(ci, carry):
            c0 = pl.multiple_of(ci * CHUNK, CHUNK)
            z = jnp.sum(fc2_ref[pl.ds(c0, CHUNK), :] * h,
                        axis=1, keepdims=True)                          # (8, 1)
            ca_ref[pl.ds(c0, CHUNK), :] = jax.nn.sigmoid(z)
            return carry

        lax.fori_loop(0, n_chunks, fc2_body, 0, unroll=unroll)

        # -------- channel-wise avg / max of x*ca (x_ca is never materialized) --------
        def pool_body(ci, carry):
            s_acc, m_acc = carry
            c0 = pl.multiple_of(ci * CHUNK, CHUNK)
            xg = (x_ref[b, pl.ds(c0, CHUNK), :].astype(jnp.float32)
                  * ca_ref[pl.ds(c0, CHUNK), :])                        # (8, HW)
            return (s_acc + jnp.sum(xg, axis=0, keepdims=True),
                    jnp.maximum(m_acc, jnp.max(xg, axis=0, keepdims=True)))

        s_sum, mmax = lax.fori_loop(
            0, n_chunks, pool_body,
            (jnp.zeros((1, hw), jnp.float32),
             jnp.full((1, hw), -jnp.inf, jnp.float32)),
            unroll=unroll)
        am_ref[pl.ds(0, 1), :] = s_sum * inv_c                          # channel mean
        am_ref[pl.ds(1, 1), :] = mmax                                   # channel max
        am = am_ref[...]                                                # (8, HW), rows 2..7 = 0

        # ---------------- spatial attention: 7x7 conv via rolls + MXU dots ----------------
        # Horizontal (dj) taps: 7 aligned lane rolls of the 8-row avg/max slab, masked at
        # column boundaries, written as adjacent row pairs of the 16-row tap stack.
        for j in range(K):
            dj = j - PAD
            rolled = pltpu.roll(am, (-dj) % hw, 1)                      # (8, HW)
            taps_ref[pl.ds(2 * j, 2), :] = (rolled[0:2, :]
                                            * maskj_ref[pl.ds(j, 1), :])

        taps = taps_ref[...]                                            # (16, HW)
        s = jnp.full((1, hw), conv_b_ref[0], dtype=jnp.float32)
        # Vertical (di) taps: 7 lane rolls by di*W, each consumed by a (1,16)x(16,HW)
        # MXU dot against the rearranged conv weights, masked at row boundaries.
        for i in range(K):
            di = i - PAD
            rolled = pltpu.roll(taps, (-(di * width)) % hw, 1)          # (16, HW)
            contrib = jnp.dot(wrows_ref[pl.ds(i, 1), :], rolled,
                              preferred_element_type=jnp.float32)       # (1, HW)
            s = s + contrib * maski_ref[pl.ds(i, 1), :]
        sa = jax.nn.sigmoid(s)                                          # (1, HW) spatial gate

        # ---------------- epilogue: out = x * ca * sa, chunked lane-dense store ----------
        def store_body(ci, carry):
            c0 = pl.multiple_of(ci * CHUNK, CHUNK)
            xg = (x_ref[b, pl.ds(c0, CHUNK), :].astype(jnp.float32)
                  * ca_ref[pl.ds(c0, CHUNK), :])
            o_ref[b, pl.ds(c0, CHUNK), :] = (xg * sa).astype(o_ref.dtype)
            return carry

        lax.fori_loop(0, n_chunks, store_body, 0, unroll=unroll)


# ----------------------------------- Wrapper --------------------------------------------
def _pick_bt(batch):
    # Fold batch elements per grid step to amortize per-step overhead, but keep at least
    # 2 grid steps so both v7x TensorCores get work (v5e/v6e have 1 TC, so no downside).
    for bt in (8, 4, 2):
        if batch % bt == 0 and batch // bt >= 2:
            return bt
    return 1


def cbam_forward(x, fc1_w, fc2_w, conv_w, conv_b):
    B, C, H, W = x.shape
    hid = fc1_w.shape[0]
    HW = H * W
    assert HW % 128 == 0, "H*W must be a multiple of 128 for the lane-dense layout"
    assert C % CHUNK == 0, "C must be a multiple of 8 (sublane chunking)"

    bt = _pick_bt(B)

    # Lane-dense view: HW on lanes (layout plumbing outside the kernel).
    x2 = x.reshape(B, C, HW)

    # Parameter rearrangement (tiny, computed once by XLA).
    fc1t = fc1_w.T.astype(jnp.float32)                     # (C, hid)
    fc2 = fc2_w.astype(jnp.float32)                        # (C, hid)
    # wrows[i, 2*j + m] = conv_w[0, m, i, j]; columns 14,15 are zero (MXU pad rows).
    wrows = jnp.transpose(conv_w[0].astype(jnp.float32), (1, 2, 0)).reshape(K, 2 * K)
    wrows = jnp.concatenate([wrows, jnp.zeros((K, 16 - 2 * K), jnp.float32)], axis=1)

    # Conv boundary masks over the flattened H*W layout (depend only on H, W, K).
    pos = jnp.arange(HW, dtype=jnp.int32)
    col = pos % W
    row = pos // W
    offs = jnp.arange(K, dtype=jnp.int32) - PAD
    mask_j = (((col[None, :] + offs[:, None]) >= 0)
              & ((col[None, :] + offs[:, None]) < W)).astype(jnp.float32)   # (K, HW)
    mask_i = (((row[None, :] + offs[:, None]) >= 0)
              & ((row[None, :] + offs[:, None]) < H)).astype(jnp.float32)   # (K, HW)

    kernel = functools.partial(cbam_kernel, width=W, hw=HW, n_chan=C, hidden=hid, bt=bt)

    # VMEM budget: in+out double-buffered blocks + constants + scratch + headroom.
    itemsize = jnp.dtype(x.dtype).itemsize
    block_bytes = bt * C * HW * itemsize
    const_bytes = 4 * (2 * C * hid + K * 16 + 2 * K * HW)
    scratch_bytes = 4 * (C * 128 + (8 + 16) * HW)          # ca scratch lane-pads to 128
    vmem_limit = int(min(max(4 * block_bytes + 2 * const_bytes + scratch_bytes
                             + (4 << 20), 16 << 20), 64 << 20))

    out2 = pl.pallas_call(
        kernel,
        out_shape=jax.ShapeDtypeStruct((B, C, HW), x.dtype),
        grid_spec=pltpu.PrefetchScalarGridSpec(
            num_scalar_prefetch=0,
            grid=(B // bt,),
            in_specs=[
                pl.BlockSpec((bt, C, HW), lambda g: (g, 0, 0)),     # x (lane-dense)
                pl.BlockSpec((C, hid), lambda g: (0, 0)),           # fc1.weight.T
                pl.BlockSpec((C, hid), lambda g: (0, 0)),           # fc2.weight
                pl.BlockSpec((K, 16), lambda g: (0, 0)),            # rearranged conv weights
                pl.BlockSpec((K, HW), lambda g: (0, 0)),            # column-validity masks
                pl.BlockSpec((K, HW), lambda g: (0, 0)),            # row-validity masks
                pl.BlockSpec(memory_space=pltpu.MemorySpace.SMEM),  # conv bias scalar
            ],
            out_specs=pl.BlockSpec((bt, C, HW), lambda g: (g, 0, 0)),
            scratch_shapes=[
                pltpu.VMEM((C, 1), jnp.float32),       # per-channel sigmoid gates
                pltpu.VMEM((CHUNK, HW), jnp.float32),  # avg/max maps (8-row aligned)
                pltpu.VMEM((16, HW), jnp.float32),     # horizontal tap stack (MXU rhs)
            ],
        ),
        compiler_params=pltpu.CompilerParams(
            dimension_semantics=("parallel",),
            vmem_limit_bytes=vmem_limit,
        ),
    )(x2, fc1t, fc2, wrows, mask_j, mask_i, conv_b.astype(jnp.float32))

    return out2.reshape(B, C, H, W)


# ------------------------------- Pure-JAX reference -------------------------------------
def cbam_ref(x, fc1_w, fc2_w, conv_w, conv_b):
    y = jnp.mean(x, axis=(2, 3))                              # adaptive_avg_pool2d -> (B, C)
    h = jax.nn.relu(y @ fc1_w.T)
    z = jax.nn.sigmoid(h @ fc2_w.T)
    x_ca = x * z[:, :, None, None]
    avg = jnp.mean(x_ca, axis=1, keepdims=True)
    mx = jnp.max(x_ca, axis=1, keepdims=True)
    cat = jnp.concatenate([avg, mx], axis=1)
    s = lax.conv_general_dilated(cat, conv_w, (1, 1), [(PAD, PAD), (PAD, PAD)],
                                 dimension_numbers=('NCHW', 'OIHW', 'NCHW'))
    s = s + conv_b.reshape(1, 1, 1, 1)
    return x_ca * jax.nn.sigmoid(s)


if __name__ == "__main__":
    B, C, H, W = 2, 32, 16, 16
    reduction = 16
    hid = C // reduction                                      # = 2

    key = jax.random.PRNGKey(0)
    k1, k2, k3, k4, k5 = jax.random.split(key, 5)
    x = jax.random.normal(k1, (B, C, H, W), jnp.float32)
    # Deterministic synthetic parameters (shapes from the module's __init__).
    fc1_w = jax.random.normal(k2, (hid, C), jnp.float32) * (1.0 / jnp.sqrt(C))
    fc2_w = jax.random.normal(k3, (C, hid), jnp.float32) * (1.0 / jnp.sqrt(hid))
    conv_w = jax.random.normal(k4, (1, 2, K, K), jnp.float32) * 0.1
    conv_b = jax.random.normal(k5, (1,), jnp.float32) * 0.1

    out = cbam_forward(x, fc1_w, fc2_w, conv_w, conv_b)
    out = jax.block_until_ready(out)

    ref = cbam_ref(x, fc1_w, fc2_w, conv_w, conv_b)
    assert out.shape == ref.shape and out.dtype == ref.dtype
    assert jnp.allclose(out, ref, rtol=1e-4, atol=1e-4), \
        f"max abs diff = {float(jnp.max(jnp.abs(out - ref)))}"
    print("KERNEL_OK")
</pallas_src>

<mosaic_0001>
module attributes {stable_mosaic.version = 11 : i64} {
  func.func @cbam_kernel(%arg0: i32, %arg1: memref<1x32x256xf32, #tpu.memory_space<vmem>>, %arg2: memref<32x2xf32, #tpu.memory_space<vmem>>, %arg3: memref<32x2xf32, #tpu.memory_space<vmem>>, %arg4: memref<7x16xf32, #tpu.memory_space<vmem>>, %arg5: memref<7x256xf32, #tpu.memory_space<vmem>>, %arg6: memref<7x256xf32, #tpu.memory_space<vmem>>, %arg7: memref<1xf32, #tpu.memory_space<smem>>, %arg8: memref<1x32x256xf32, #tpu.memory_space<vmem>>, %arg9: memref<32x1xf32, #tpu.memory_space<vmem>>, %arg10: memref<8x256xf32, #tpu.memory_space<vmem>>, %arg11: memref<16x256xf32, #tpu.memory_space<vmem>>) attributes {dimension_semantics = [#tpu.dimension_semantics<parallel>], iteration_bounds = array<i64: 2>, scalar_prefetch = 0 : i64, scratch_operands = 3 : i64, tpu.core_type = #tpu.core_type<tc>, window_params = [{transform_indices = @transform_0, window_bounds = array<i64: 1, 32, 256>}, {pipeline_mode = #tpu.pipeline_mode<synchronous>, transform_indices = @transform_1, window_bounds = array<i64: 32, 2>}, {pipeline_mode = #tpu.pipeline_mode<synchronous>, transform_indices = @transform_2, window_bounds = array<i64: 32, 2>}, {pipeline_mode = #tpu.pipeline_mode<synchronous>, transform_indices = @transform_3, window_bounds = array<i64: 7, 16>}, {pipeline_mode = #tpu.pipeline_mode<synchronous>, transform_indices = @transform_4, window_bounds = array<i64: 7, 256>}, {pipeline_mode = #tpu.pipeline_mode<synchronous>, transform_indices = @transform_5, window_bounds = array<i64: 7, 256>}, {transform_indices = @transform_6, window_bounds = array<i64: 1>}, {transform_indices = @transform_7, window_bounds = array<i64: 1, 32, 256>}]} {
    %cst = arith.constant 0.000000e+00 : f32
    %0 = vector.broadcast %cst : f32 to vector<2x256xf32>
    %c14 = arith.constant 14 : index
    %c0 = arith.constant 0 : index
    %1 = vector.load %arg11[%c14, %c0] : memref<16x256xf32, #tpu.memory_space<vmem>>, vector<2x256xf32>
    tpu.vector_store %arg11[%c14, %c0], %0 {strides = array<i32>} : memref<16x256xf32, #tpu.memory_space<vmem>>, vector<2x256xf32>,
    %cst_0 = arith.constant 0.000000e+00 : f32
    %2 = vector.broadcast %cst_0 : f32 to vector<6x256xf32>
    %c2 = arith.constant 2 : index
    %c0_1 = arith.constant 0 : index
    %3 = vector.load %arg10[%c2, %c0_1] : memref<8x256xf32, #tpu.memory_space<vmem>>, vector<6x256xf32>
    tpu.vector_store %arg10[%c2, %c0_1], %2 {strides = array<i32>} : memref<8x256xf32, #tpu.memory_space<vmem>>, vector<6x256xf32>,
    %cst_2 = arith.constant 0.000000e+00 : f32
    %4 = vector.broadcast %cst_2 : f32 to vector<1x2xf32>
    %cst_3 = arith.constant 3.906250e-03 : f32
    %c0_i32 = arith.constant 0 : i32
    %c8_i32 = arith.constant 8 : i32
    %5 = arith.muli %c0_i32, %c8_i32 : i32
    %6 = tpu.assume_multiple %5, 8 : i32
    %c0_4 = arith.constant 0 : index
    %7 = arith.index_cast %6 : i32 to index
    %c0_5 = arith.constant 0 : index
    %8 = vector.load %arg1[%c0_4, %7, %c0_5] : memref<1x32x256xf32, #tpu.memory_space<vmem>>, vector<1x8x256xf32>
    %9 = vector.shape_cast %8 : vector<1x8x256xf32> to vector<8x256xf32>
    %cst_6 = arith.constant dense<0.000000e+00> : vector<8xf32>
    %10 = vector.multi_reduction <add>, %9, %cst_6 [1] : vector<8x256xf32> to vector<8xf32>
    %11 = vector.shape_cast %10 : vector<8xf32> to vector<8x1xf32>
    %12 = vector.broadcast %cst_3 : f32 to vector<8x1xf32>
    %13 = arith.mulf %11, %12 : vector<8x1xf32>
    %14 = arith.index_cast %6 : i32 to index
    %c0_7 = arith.constant 0 : index
    %15 = vector.load %arg2[%14, %c0_7] : memref<32x2xf32, #tpu.memory_space<vmem>>, vector<8x2xf32>
    %16 = vector.broadcast %13 : vector<8x1xf32> to vector<8x2xf32>
    %17 = arith.mulf %15, %16 : vector<8x2xf32>
    %cst_8 = arith.constant dense<0.000000e+00> : vector<2xf32>
    %18 = vector.multi_reduction <add>, %17, %cst_8 [0] : vector<8x2xf32> to vector<2xf32>
    %19 = vector.shape_cast %18 : vector<2xf32> to vector<1x2xf32>
    %20 = arith.addf %4, %19 : vector<1x2xf32>
    %c1_i32 = arith.constant 1 : i32
    %c8_i32_9 = arith.constant 8 : i32
    %21 = arith.muli %c1_i32, %c8_i32_9 : i32
    %22 = tpu.assume_multiple %21, 8 : i32
    %c0_10 = arith.constant 0 : index
    %23 = arith.index_cast %22 : i32 to index
    %c0_11 = arith.constant 0 : index
    %24 = vector.load %arg1[%c0_10, %23, %c0_11] : memref<1x32x256xf32, #tpu.memory_space<vmem>>, vector<1x8x256xf32>
    %25 = vector.shape_cast %24 : vector<1x8x256xf32> to vector<8x256xf32>
    %cst_12 = arith.constant dense<0.000000e+00> : vector<8xf32>
    %26 = vector.multi_reduction <add>, %25, %cst_12 [1] : vector<8x256xf32> to vector<8xf32>
    %27 = vector.shape_cast %26 : vector<8xf32> to vector<8x1xf32>
    %28 = vector.broadcast %cst_3 : f32 to vector<8x1xf32>
    %29 = arith.mulf %27, %28 : vector<8x1xf32>
    %30 = arith.index_cast %22 : i32 to index
    %c0_13 = arith.constant 0 : index
    %31 = vector.load %arg2[%30, %c0_13] : memref<32x2xf32, #tpu.memory_space<vmem>>, vector<8x2xf32>
    %32 = vector.broadcast %29 : vector<8x1xf32> to vector<8x2xf32>
    %33 = arith.mulf %31, %32 : vector<8x2xf32>
    %cst_14 = arith.constant dense<0.000000e+00> : vector<2xf32>
    %34 = vector.multi_reduction <add>, %33, %cst_14 [0] : vector<8x2xf32> to vector<2xf32>
    %35 = vector.shape_cast %34 : vector<2xf32> to vector<1x2xf32>
    %36 = arith.addf %20, %35 : vector<1x2xf32>
    %c2_i32 = arith.constant 2 : i32
    %c8_i32_15 = arith.constant 8 : i32
    %37 = arith.muli %c2_i32, %c8_i32_15 : i32
    %38 = tpu.assume_multiple %37, 8 : i32
    %c0_16 = arith.constant 0 : index
    %39 = arith.index_cast %38 : i32 to index
    %c0_17 = arith.constant 0 : index
    %40 = vector.load %arg1[%c0_16, %39, %c0_17] : memref<1x32x256xf32, #tpu.memory_space<vmem>>, vector<1x8x256xf32>
    %41 = vector.shape_cast %40 : vector<1x8x256xf32> to vector<8x256xf32>
    %cst_18 = arith.constant dense<0.000000e+00> : vector<8xf32>
    %42 = vector.multi_reduction <add>, %41, %cst_18 [1] : vector<8x256xf32> to vector<8xf32>
    %43 = vector.shape_cast %42 : vector<8xf32> to vector<8x1xf32>
    %44 = vector.broadcast %cst_3 : f32 to vector<8x1xf32>
    %45 = arith.mulf %43, %44 : vector<8x1xf32>
    %46 = arith.index_cast %38 : i32 to index
    %c0_19 = arith.constant 0 : index
    %47 = vector.load %arg2[%46, %c0_19] : memref<32x2xf32, #tpu.memory_space<vmem>>, vector<8x2xf32>
    %48 = vector.broadcast %45 : vector<8x1xf32> to vector<8x2xf32>
    %49 = arith.mulf %47, %48 : vector<8x2xf32>
    %cst_20 = arith.constant dense<0.000000e+00> : vector<2xf32>
    %50 = vector.multi_reduction <add>, %49, %cst_20 [0] : vector<8x2xf32> to vector<2xf32>
    %51 = vector.shape_cast %50 : vector<2xf32> to vector<1x2xf32>
    %52 = arith.addf %36, %51 : vector<1x2xf32>
    %c3_i32 = arith.constant 3 : i32
    %c8_i32_21 = arith.constant 8 : i32
    %53 = arith.muli %c3_i32, %c8_i32_21 : i32
    %54 = tpu.assume_multiple %53, 8 : i32
    %c0_22 = arith.constant 0 : index
    %55 = arith.index_cast %54 : i32 to index
    %c0_23 = arith.constant 0 : index
    %56 = vector.load %arg1[%c0_22, %55, %c0_23] : memref<1x32x256xf32, #tpu.memory_space<vmem>>, vector<1x8x256xf32>
    %57 = vector.shape_cast %56 : vector<1x8x256xf32> to vector<8x256xf32>
    %cst_24 = arith.constant dense<0.000000e+00> : vector<8xf32>
    %58 = vector.multi_reduction <add>, %57, %cst_24 [1] : vector<8x256xf32> to vector<8xf32>
    %59 = vector.shape_cast %58 : vector<8xf32> to vector<8x1xf32>
    %60 = vector.broadcast %cst_3 : f32 to vector<8x1xf32>
    %61 = arith.mulf %59, %60 : vector<8x1xf32>
    %62 = arith.index_cast %54 : i32 to index
    %c0_25 = arith.constant 0 : index
    %63 = vector.load %arg2[%62, %c0_25] : memref<32x2xf32, #tpu.memory_space<vmem>>, vector<8x2xf32>
    %64 = vector.broadcast %61 : vector<8x1xf32> to vector<8x2xf32>
    %65 = arith.mulf %63, %64 : vector<8x2xf32>
    %cst_26 = arith.constant dense<0.000000e+00> : vector<2xf32>
    %66 = vector.multi_reduction <add>, %65, %cst_26 [0] : vector<8x2xf32> to vector<2xf32>
    %67 = vector.shape_cast %66 : vector<2xf32> to vector<1x2xf32>
    %68 = arith.addf %52, %67 : vector<1x2xf32>
    %c4_i32 = arith.constant 4 : i32
    %cst_27 = arith.constant 0.000000e+00 : f32
    %69 = vector.broadcast %cst_27 : f32 to vector<1x2xf32>
    %70 = arith.maximumf %68, %69 : vector<1x2xf32>
    %c0_i32_28 = arith.constant 0 : i32
    %c8_i32_29 = arith.constant 8 : i32
    %71 = arith.muli %c0_i32_28, %c8_i32_29 : i32
    %72 = tpu.assume_multiple %71, 8 : i32
    %73 = arith.index_cast %72 : i32 to index
    %c0_30 = arith.constant 0 : index
    %74 = vector.load %arg3[%73, %c0_30] : memref<32x2xf32, #tpu.memory_space<vmem>>, vector<8x2xf32>
    %75 = vector.broadcast %70 : vector<1x2xf32> to vector<8x2xf32>
    %76 = arith.mulf %74, %75 : vector<8x2xf32>
    %cst_31 = arith.constant dense<0.000000e+00> : vector<8xf32>
    %77 = vector.multi_reduction <add>, %76, %cst_31 [1] : vector<8x2xf32> to vector<8xf32>
    %78 = vector.shape_cast %77 : vector<8xf32> to vector<8x1xf32>
    %79 = arith.negf %78 : vector<8x1xf32>
    %80 = math.exp %79 : vector<8x1xf32>
    %cst_32 = arith.constant 1.000000e+00 : f32
    %81 = vector.broadcast %cst_32 : f32 to vector<8x1xf32>
    %82 = arith.addf %81, %80 : vector<8x1xf32>
    %83 = arith.divf %81, %82 : vector<8x1xf32>
    %84 = arith.index_cast %72 : i32 to index
    %c0_33 = arith.constant 0 : index
    %85 = vector.load %arg9[%84, %c0_33] : memref<32x1xf32, #tpu.memory_space<vmem>>, vector<8x1xf32>
    tpu.vector_store %arg9[%84, %c0_33], %83 {strides = array<i32>} : memref<32x1xf32, #tpu.memory_space<vmem>>, vector<8x1xf32>,
    %c1_i32_34 = arith.constant 1 : i32
    %c8_i32_35 = arith.constant 8 : i32
    %86 = arith.muli %c1_i32_34, %c8_i32_35 : i32
    %87 = tpu.assume_multiple %86, 8 : i32
    %88 = arith.index_cast %87 : i32 to index
    %c0_36 = arith.constant 0 : index
    %89 = vector.load %arg3[%88, %c0_36] : memref<32x2xf32, #tpu.memory_space<vmem>>, vector<8x2xf32>
    %90 = vector.broadcast %70 : vector<1x2xf32> to vector<8x2xf32>
    %91 = arith.mulf %89, %90 : vector<8x2xf32>
    %cst_37 = arith.constant dense<0.000000e+00> : vector<8xf32>
    %92 = vector.multi_reduction <add>, %91, %cst_37 [1] : vector<8x2xf32> to vector<8xf32>
    %93 = vector.shape_cast %92 : vector<8xf32> to vector<8x1xf32>
    %94 = arith.negf %93 : vector<8x1xf32>
    %95 = math.exp %94 : vector<8x1xf32>
    %cst_38 = arith.constant 1.000000e+00 : f32
    %96 = vector.broadcast %cst_38 : f32 to vector<8x1xf32>
    %97 = arith.addf %96, %95 : vector<8x1xf32>
    %98 = arith.divf %96, %97 : vector<8x1xf32>
    %99 = arith.index_cast %87 : i32 to index
    %c0_39 = arith.constant 0 : index
    %100 = vector.load %arg9[%99, %c0_39] : memref<32x1xf32, #tpu.memory_space<vmem>>, vector<8x1xf32>
    tpu.vector_store %arg9[%99, %c0_39], %98 {strides = array<i32>} : memref<32x1xf32, #tpu.memory_space<vmem>>, vector<8x1xf32>,
    %c2_i32_40 = arith.constant 2 : i32
    %c8_i32_41 = arith.constant 8 : i32
    %101 = arith.muli %c2_i32_40, %c8_i32_41 : i32
    %102 = tpu.assume_multiple %101, 8 : i32
    %103 = arith.index_cast %102 : i32 to index
    %c0_42 = arith.constant 0 : index
    %104 = vector.load %arg3[%103, %c0_42] : memref<32x2xf32, #tpu.memory_space<vmem>>, vector<8x2xf32>
    %105 = vector.broadcast %70 : vector<1x2xf32> to vector<8x2xf32>
    %106 = arith.mulf %104, %105 : vector<8x2xf32>
    %cst_43 = arith.constant dense<0.000000e+00> : vector<8xf32>
    %107 = vector.multi_reduction <add>, %106, %cst_43 [1] : vector<8x2xf32> to vector<8xf32>
    %108 = vector.shape_cast %107 : vector<8xf32> to vector<8x1xf32>
    %109 = arith.negf %108 : vector<8x1xf32>
    %110 = math.exp %109 : vector<8x1xf32>
    %cst_44 = arith.constant 1.000000e+00 : f32
    %111 = vector.broadcast %cst_44 : f32 to vector<8x1xf32>
    %112 = arith.addf %111, %110 : vector<8x1xf32>
    %113 = arith.divf %111, %112 : vector<8x1xf32>
    %114 = arith.index_cast %102 : i32 to index
    %c0_45 = arith.constant 0 : index
    %115 = vector.load %arg9[%114, %c0_45] : memref<32x1xf32, #tpu.memory_space<vmem>>, vector<8x1xf32>
    tpu.vector_store %arg9[%114, %c0_45], %113 {strides = array<i32>} : memref<32x1xf32, #tpu.memory_space<vmem>>, vector<8x1xf32>,
    %c3_i32_46 = arith.constant 3 : i32
    %c8_i32_47 = arith.constant 8 : i32
    %116 = arith.muli %c3_i32_46, %c8_i32_47 : i32
    %117 = tpu.assume_multiple %116, 8 : i32
    %118 = arith.index_cast %117 : i32 to index
    %c0_48 = arith.constant 0 : index
    %119 = vector.load %arg3[%118, %c0_48] : memref<32x2xf32, #tpu.memory_space<vmem>>, vector<8x2xf32>
    %120 = vector.broadcast %70 : vector<1x2xf32> to vector<8x2xf32>
    %121 = arith.mulf %119, %120 : vector<8x2xf32>
    %cst_49 = arith.constant dense<0.000000e+00> : vector<8xf32>
    %122 = vector.multi_reduction <add>, %121, %cst_49 [1] : vector<8x2xf32> to vector<8xf32>
    %123 = vector.shape_cast %122 : vector<8xf32> to vector<8x1xf32>
    %124 = arith.negf %123 : vector<8x1xf32>
    %125 = math.exp %124 : vector<8x1xf32>
    %cst_50 = arith.constant 1.000000e+00 : f32
    %126 = vector.broadcast %cst_50 : f32 to vector<8x1xf32>
    %127 = arith.addf %126, %125 : vector<8x1xf32>
    %128 = arith.divf %126, %127 : vector<8x1xf32>
    %129 = arith.index_cast %117 : i32 to index
    %c0_51 = arith.constant 0 : index
    %130 = vector.load %arg9[%129, %c0_51] : memref<32x1xf32, #tpu.memory_space<vmem>>, vector<8x1xf32>
    tpu.vector_store %arg9[%129, %c0_51], %128 {strides = array<i32>} : memref<32x1xf32, #tpu.memory_space<vmem>>, vector<8x1xf32>,
    %c4_i32_52 = arith.constant 4 : i32
    %cst_53 = arith.constant 0.000000e+00 : f32
    %131 = vector.broadcast %cst_53 : f32 to vector<1x256xf32>
    %cst_54 = arith.constant 0xFF800000 : f32
    %132 = vector.broadcast %cst_54 : f32 to vector<1x256xf32>
    %c0_i32_55 = arith.constant 0 : i32
    %c8_i32_56 = arith.constant 8 : i32
    %133 = arith.muli %c0_i32_55, %c8_i32_56 : i32
    %134 = tpu.assume_multiple %133, 8 : i32
    %c0_57 = arith.constant 0 : index
    %135 = arith.index_cast %134 : i32 to index
    %c0_58 = arith.constant 0 : index
    %136 = vector.load %arg1[%c0_57, %135, %c0_58] : memref<1x32x256xf32, #tpu.memory_space<vmem>>, vector<1x8x256xf32>
    %137 = vector.shape_cast %136 : vector<1x8x256xf32> to vector<8x256xf32>
    %138 = arith.index_cast %134 : i32 to index
    %c0_59 = arith.constant 0 : index
    %139 = vector.load %arg9[%138, %c0_59] : memref<32x1xf32, #tpu.memory_space<vmem>>, vector<8x1xf32>
    %140 = vector.broadcast %139 : vector<8x1xf32> to vector<8x256xf32>
    %141 = arith.mulf %137, %140 : vector<8x256xf32>
    %cst_60 = arith.constant dense<0.000000e+00> : vector<256xf32>
    %142 = vector.multi_reduction <add>, %141, %cst_60 [0] : vector<8x256xf32> to vector<256xf32>
    %143 = vector.shape_cast %142 : vector<256xf32> to vector<1x256xf32>
    %144 = arith.addf %131, %143 : vector<1x256xf32>
    %cst_61 = arith.constant dense<0xFF800000> : vector<256xf32>
    %145 = vector.multi_reduction <maximumf>, %141, %cst_61 [0] : vector<8x256xf32> to vector<256xf32>
    %146 = vector.shape_cast %145 : vector<256xf32> to vector<1x256xf32>
    %147 = arith.maximumf %132, %146 : vector<1x256xf32>
    %c1_i32_62 = arith.constant 1 : i32
    %c8_i32_63 = arith.constant 8 : i32
    %148 = arith.muli %c1_i32_62, %c8_i32_63 : i32
    %149 = tpu.assume_multiple %148, 8 : i32
    %c0_64 = arith.constant 0 : index
    %150 = arith.index_cast %149 : i32 to index
    %c0_65 = arith.constant 0 : index
    %151 = vector.load %arg1[%c0_64, %150, %c0_65] : memref<1x32x256xf32, #tpu.memory_space<vmem>>, vector<1x8x256xf32>
    %152 = vector.shape_cast %151 : vector<1x8x256xf32> to vector<8x256xf32>
    %153 = arith.index_cast %149 : i32 to index
    %c0_66 = arith.constant 0 : index
    %154 = vector.load %arg9[%153, %c0_66] : memref<32x1xf32, #tpu.memory_space<vmem>>, vector<8x1xf32>
    %155 = vector.broadcast %154 : vector<8x1xf32> to vector<8x256xf32>
    %156 = arith.mulf %152, %155 : vector<8x256xf32>
    %cst_67 = arith.constant dense<0.000000e+00> : vector<256xf32>
    %157 = vector.multi_reduction <add>, %156, %cst_67 [0] : vector<8x256xf32> to vector<256xf32>
    %158 = vector.shape_cast %157 : vector<256xf32> to vector<1x256xf32>
    %159 = arith.addf %144, %158 : vector<1x256xf32>
    %cst_68 = arith.constant dense<0xFF800000> : vector<256xf32>
    %160 = vector.multi_reduction <maximumf>, %156, %cst_68 [0] : vector<8x256xf32> to vector<256xf32>
    %161 = vector.shape_cast %160 : vector<256xf32> to vector<1x256xf32>
    %162 = arith.maximumf %147, %161 : vector<1x256xf32>
    %c2_i32_69 = arith.constant 2 : i32
    %c8_i32_70 = arith.constant 8 : i32
    %163 = arith.muli %c2_i32_69, %c8_i32_70 : i32
    %164 = tpu.assume_multiple %163, 8 : i32
    %c0_71 = arith.constant 0 : index
    %165 = arith.index_cast %164 : i32 to index
    %c0_72 = arith.constant 0 : index
    %166 = vector.load %arg1[%c0_71, %165, %c0_72] : memref<1x32x256xf32, #tpu.memory_space<vmem>>, vector<1x8x256xf32>
    %167 = vector.shape_cast %166 : vector<1x8x256xf32> to vector<8x256xf32>
    %168 = arith.index_cast %164 : i32 to index
    %c0_73 = arith.constant 0 : index
    %169 = vector.load %arg9[%168, %c0_73] : memref<32x1xf32, #tpu.memory_space<vmem>>, vector<8x1xf32>
    %170 = vector.broadcast %169 : vector<8x1xf32> to vector<8x256xf32>
    %171 = arith.mulf %167, %170 : vector<8x256xf32>
    %cst_74 = arith.constant dense<0.000000e+00> : vector<256xf32>
    %172 = vector.multi_reduction <add>, %171, %cst_74 [0] : vector<8x256xf32> to vector<256xf32>
    %173 = vector.shape_cast %172 : vector<256xf32> to vector<1x256xf32>
    %174 = arith.addf %159, %173 : vector<1x256xf32>
    %cst_75 = arith.constant dense<0xFF800000> : vector<256xf32>
    %175 = vector.multi_reduction <maximumf>, %171, %cst_75 [0] : vector<8x256xf32> to vector<256xf32>
    %176 = vector.shape_cast %175 : vector<256xf32> to vector<1x256xf32>
    %177 = arith.maximumf %162, %176 : vector<1x256xf32>
    %c3_i32_76 = arith.constant 3 : i32
    %c8_i32_77 = arith.constant 8 : i32
    %178 = arith.muli %c3_i32_76, %c8_i32_77 : i32
    %179 = tpu.assume_multiple %178, 8 : i32
    %c0_78 = arith.constant 0 : index
    %180 = arith.index_cast %179 : i32 to index
    %c0_79 = arith.constant 0 : index
    %181 = vector.load %arg1[%c0_78, %180, %c0_79] : memref<1x32x256xf32, #tpu.memory_space<vmem>>, vector<1x8x256xf32>
    %182 = vector.shape_cast %181 : vector<1x8x256xf32> to vector<8x256xf32>
    %183 = arith.index_cast %179 : i32 to index
    %c0_80 = arith.constant 0 : index
    %184 = vector.load %arg9[%183, %c0_80] : memref<32x1xf32, #tpu.memory_space<vmem>>, vector<8x1xf32>
    %185 = vector.broadcast %184 : vector<8x1xf32> to vector<8x256xf32>
    %186 = arith.mulf %182, %185 : vector<8x256xf32>
    %cst_81 = arith.constant dense<0.000000e+00> : vector<256xf32>
    %187 = vector.multi_reduction <add>, %186, %cst_81 [0] : vector<8x256xf32> to vector<256xf32>
    %188 = vector.shape_cast %187 : vector<256xf32> to vector<1x256xf32>
    %189 = arith.addf %174, %188 : vector<1x256xf32>
    %cst_82 = arith.constant dense<0xFF800000> : vector<256xf32>
    %190 = vector.multi_reduction <maximumf>, %186, %cst_82 [0] : vector<8x256xf32> to vector<256xf32>
    %191 = vector.shape_cast %190 : vector<256xf32> to vector<1x256xf32>
    %192 = arith.maximumf %177, %191 : vector<1x256xf32>
    %c4_i32_83 = arith.constant 4 : i32
    %cst_84 = arith.constant 3.125000e-02 : f32
    %193 = vector.broadcast %cst_84 : f32 to vector<1x256xf32>
    %194 = arith.mulf %189, %193 : vector<1x256xf32>
    %c0_85 = arith.constant 0 : index
    %c0_86 = arith.constant 0 : index
    %195 = vector.load %arg10[%c0_85, %c0_86] : memref<8x256xf32, #tpu.memory_space<vmem>>, vector<1x256xf32>
    tpu.vector_store %arg10[%c0_85, %c0_86], %194 {strides = array<i32>} : memref<8x256xf32, #tpu.memory_space<vmem>>, vector<1x256xf32>,
    %c1 = arith.constant 1 : index
    %c0_87 = arith.constant 0 : index
    %196 = vector.load %arg10[%c1, %c0_87] : memref<8x256xf32, #tpu.memory_space<vmem>>, vector<1x256xf32>
    tpu.vector_store %arg10[%c1, %c0_87], %192 {strides = array<i32>} : memref<8x256xf32, #tpu.memory_space<vmem>>, vector<1x256xf32>,
    %c0_88 = arith.constant 0 : index
    %c0_89 = arith.constant 0 : index
    %197 = vector.load %arg10[%c0_88, %c0_89] : memref<8x256xf32, #tpu.memory_space<vmem>>, vector<8x256xf32>
    %c3_i32_90 = arith.constant 3 : i32
    %198 = tpu.dynamic_rotate %197 by %c3_i32_90 dim 1 : vector<8x256xf32>, i32 -> vector<8x256xf32>
    %199 = vector.extract_strided_slice %198 {offsets = [0, 0], sizes = [2, 256], strides = [1, 1]} : vector<8x256xf32> to vector<2x256xf32>
    %c0_91 = arith.constant 0 : index
    %c0_92 = arith.constant 0 : index
    %200 = vector.load %arg5[%c0_91, %c0_92] : memref<7x256xf32, #tpu.memory_space<vmem>>, vector<1x256xf32>
    %201 = vector.broadcast %200 : vector<1x256xf32> to vector<2x256xf32>
    %202 = arith.mulf %199, %201 : vector<2x256xf32>
    %c0_93 = arith.constant 0 : index
    %c0_94 = arith.constant 0 : index
    %203 = vector.load %arg11[%c0_93, %c0_94] : memref<16x256xf32, #tpu.memory_space<vmem>>, vector<2x256xf32>
    tpu.vector_store %arg11[%c0_93, %c0_94], %202 {strides = array<i32>} : memref<16x256xf32, #tpu.memory_space<vmem>>, vector<2x256xf32>,
    %c2_i32_95 = arith.constant 2 : i32
    %204 = tpu.dynamic_rotate %197 by %c2_i32_95 dim 1 : vector<8x256xf32>, i32 -> vector<8x256xf32>
    %205 = vector.extract_strided_slice %204 {offsets = [0, 0], sizes = [2, 256], strides = [1, 1]} : vector<8x256xf32> to vector<2x256xf32>
    %c1_96 = arith.constant 1 : index
    %c0_97 = arith.constant 0 : index
    %206 = vector.load %arg5[%c1_96, %c0_97] : memref<7x256xf32, #tpu.memory_space<vmem>>, vector<1x256xf32>
    %207 = vector.broadcast %206 : vector<1x256xf32> to vector<2x256xf32>
    %208 = arith.mulf %205, %207 : vector<2x256xf32>
    %c2_98 = arith.constant 2 : index
    %c0_99 = arith.constant 0 : index
    %209 = vector.load %arg11[%c2_98, %c0_99] : memref<16x256xf32, #tpu.memory_space<vmem>>, vector<2x256xf32>
    tpu.vector_store %arg11[%c2_98, %c0_99], %208 {strides = array<i32>} : memref<16x256xf32, #tpu.memory_space<vmem>>, vector<2x256xf32>,
    %c1_i32_100 = arith.constant 1 : i32
    %210 = tpu.dynamic_rotate %197 by %c1_i32_100 dim 1 : vector<8x256xf32>, i32 -> vector<8x256xf32>
    %211 = vector.extract_strided_slice %210 {offsets = [0, 0], sizes = [2, 256], strides = [1, 1]} : vector<8x256xf32> to vector<2x256xf32>
    %c2_101 = arith.constant 2 : index
    %c0_102 = arith.constant 0 : index
    %212 = vector.load %arg5[%c2_101, %c0_102] : memref<7x256xf32, #tpu.memory_space<vmem>>, vector<1x256xf32>
    %213 = vector.broadcast %212 : vector<1x256xf32> to vector<2x256xf32>
    %214 = arith.mulf %211, %213 : vector<2x256xf32>
    %c4 = arith.constant 4 : index
    %c0_103 = arith.constant 0 : index
    %215 = vector.load %arg11[%c4, %c0_103] : memref<16x256xf32, #tpu.memory_space<vmem>>, vector<2x256xf32>
    tpu.vector_store %arg11[%c4, %c0_103], %214 {strides = array<i32>} : memref<16x256xf32, #tpu.memory_space<vmem>>, vector<2x256xf32>,
    %c0_i32_104 = arith.constant 0 : i32
    %216 = tpu.dynamic_rotate %197 by %c0_i32_104 dim 1 : vector<8x256xf32>, i32 -> vector<8x256xf32>
    %217 = vector.extract_strided_slice %216 {offsets = [0, 0], sizes = [2, 256], strides = [1, 1]} : vector<8x256xf32> to vector<2x256xf32>
    %c3 = arith.constant 3 : index
    %c0_105 = arith.constant 0 : index
    %218 = vector.load %arg5[%c3, %c0_105] : memref<7x256xf32, #tpu.memory_space<vmem>>, vector<1x256xf32>
    %219 = vector.broadcast %218 : vector<1x256xf32> to vector<2x256xf32>
    %220 = arith.mulf %217, %219 : vector<2x256xf32>
    %c6 = arith.constant 6 : index
    %c0_106 = arith.constant 0 : index
    %221 = vector.load %arg11[%c6, %c0_106] : memref<16x256xf32, #tpu.memory_space<vmem>>, vector<2x256xf32>
    tpu.vector_store %arg11[%c6, %c0_106], %220 {strides = array<i32>} : memref<16x256xf32, #tpu.memory_space<vmem>>, vector<2x256xf32>,
    %c255_i32 = arith.constant 255 : i32
    %222 = tpu.dynamic_rotate %197 by %c255_i32 dim 1 : vector<8x256xf32>, i32 -> vector<8x256xf32>
    %223 = vector.extract_strided_slice %222 {offsets = [0, 0], sizes = [2, 256], strides = [1, 1]} : vector<8x256xf32> to vector<2x256xf32>
    %c4_107 = arith.constant 4 : index
    %c0_108 = arith.constant 0 : index
    %224 = vector.load %arg5[%c4_107, %c0_108] : memref<7x256xf32, #tpu.memory_space<vmem>>, vector<1x256xf32>
    %225 = vector.broadcast %224 : vector<1x256xf32> to vector<2x256xf32>
    %226 = arith.mulf %223, %225 : vector<2x256xf32>
    %c8 = arith.constant 8 : index
    %c0_109 = arith.constant 0 : index
    %227 = vector.load %arg11[%c8, %c0_109] : memref<16x256xf32, #tpu.memory_space<vmem>>, vector<2x256xf32>
    tpu.vector_store %arg11[%c8, %c0_109], %226 {strides = array<i32>} : memref<16x256xf32, #tpu.memory_space<vmem>>, vector<2x256xf32>,
    %c254_i32 = arith.constant 254 : i32
    %228 = tpu.dynamic_rotate %197 by %c254_i32 dim 1 : vector<8x256xf32>, i32 -> vector<8x256xf32>
    %229 = vector.extract_strided_slice %228 {offsets = [0, 0], sizes = [2, 256], strides = [1, 1]} : vector<8x256xf32> to vector<2x256xf32>
    %c5 = arith.constant 5 : index
    %c0_110 = arith.constant 0 : index
    %230 = vector.load %arg5[%c5, %c0_110] : memref<7x256xf32, #tpu.memory_space<vmem>>, vector<1x256xf32>
    %231 = vector.broadcast %230 : vector<1x256xf32> to vector<2x256xf32>
    %232 = arith.mulf %229, %231 : vector<2x256xf32>
    %c10 = arith.constant 10 : index
    %c0_111 = arith.constant 0 : index
    %233 = vector.load %arg11[%c10, %c0_111] : memref<16x256xf32, #tpu.memory_space<vmem>>, vector<2x256xf32>
    tpu.vector_store %arg11[%c10, %c0_111], %232 {strides = array<i32>} : memref<16x256xf32, #tpu.memory_space<vmem>>, vector<2x256xf32>,
    %c253_i32 = arith.constant 253 : i32
    %234 = tpu.dynamic_rotate %197 by %c253_i32 dim 1 : vector<8x256xf32>, i32 -> vector<8x256xf32>
    %235 = vector.extract_strided_slice %234 {offsets = [0, 0], sizes = [2, 256], strides = [1, 1]} : vector<8x256xf32> to vector<2x256xf32>
    %c6_112 = arith.constant 6 : index
    %c0_113 = arith.constant 0 : index
    %236 = vector.load %arg5[%c6_112, %c0_113] : memref<7x256xf32, #tpu.memory_space<vmem>>, vector<1x256xf32>
    %237 = vector.broadcast %236 : vector<1x256xf32> to vector<2x256xf32>
    %238 = arith.mulf %235, %237 : vector<2x256xf32>
    %c12 = arith.constant 12 : index
    %c0_114 = arith.constant 0 : index
    %239 = vector.load %arg11[%c12, %c0_114] : memref<16x256xf32, #tpu.memory_space<vmem>>, vector<2x256xf32>
    tpu.vector_store %arg11[%c12, %c0_114], %238 {strides = array<i32>} : memref<16x256xf32, #tpu.memory_space<vmem>>, vector<2x256xf32>,
    %c0_115 = arith.constant 0 : index
    %c0_116 = arith.constant 0 : index
    %240 = vector.load %arg11[%c0_115, %c0_116] : memref<16x256xf32, #tpu.memory_space<vmem>>, vector<16x256xf32>
    %c0_117 = arith.constant 0 : index
    %241 = memref.load %arg7[%c0_117] : memref<1xf32, #tpu.memory_space<smem>>
    %242 = vector.broadcast %241 : f32 to vector<1x256xf32>
    %c48_i32 = arith.constant 48 : i32
    %243 = tpu.dynamic_rotate %240 by %c48_i32 dim 1 : vector<16x256xf32>, i32 -> vector<16x256xf32>
    %c0_118 = arith.constant 0 : index
    %c0_119 = arith.constant 0 : index
    %244 = vector.load %arg4[%c0_118, %c0_119] : memref<7x16xf32, #tpu.memory_space<vmem>>, vector<1x16xf32>
    %cst_120 = arith.constant dense<0.000000e+00> : vector<1x256xf32>
    %245 = tpu.matmul %244, %243, %cst_120 {dimension_numbers = #tpu.dot_dimension_numbers<[1], [0], [0], [1], [0, 0, 1, 1], [], []>} : vector<1x16xf32>, vector<16x256xf32>, vector<1x256xf32> -> vector<1x256xf32>
    %c0_121 = arith.constant 0 : index
    %c0_122 = arith.constant 0 : index
    %246 = vector.load %arg6[%c0_121, %c0_122] : memref<7x256xf32, #tpu.memory_space<vmem>>, vector<1x256xf32>
    %247 = arith.mulf %245, %246 : vector<1x256xf32>
    %248 = arith.addf %242, %247 : vector<1x256xf32>
    %c32_i32 = arith.constant 32 : i32
    %249 = tpu.dynamic_rotate %240 by %c32_i32 dim 1 : vector<16x256xf32>, i32 -> vector<16x256xf32>
    %c1_123 = arith.constant 1 : index
    %c0_124 = arith.constant 0 : index
    %250 = vector.load %arg4[%c1_123, %c0_124] : memref<7x16xf32, #tpu.memory_space<vmem>>, vector<1x16xf32>
    %cst_125 = arith.constant dense<0.000000e+00> : vector<1x256xf32>
    %251 = tpu.matmul %250, %249, %cst_125 {dimension_numbers = #tpu.dot_dimension_numbers<[1], [0], [0], [1], [0, 0, 1, 1], [], []>} : vector<1x16xf32>, vector<16x256xf32>, vector<1x256xf32> -> vector<1x256xf32>
    %c1_126 = arith.constant 1 : index
    %c0_127 = arith.constant 0 : index
    %252 = vector.load %arg6[%c1_126, %c0_127] : memref<7x256xf32, #tpu.memory_space<vmem>>, vector<1x256xf32>
    %253 = arith.mulf %251, %252 : vector<1x256xf32>
    %254 = arith.addf %248, %253 : vector<1x256xf32>
    %c16_i32 = arith.constant 16 : i32
    %255 = tpu.dynamic_rotate %240 by %c16_i32 dim 1 : vector<16x256xf32>, i32 -> vector<16x256xf32>
    %c2_128 = arith.constant 2 : index
    %c0_129 = arith.constant 0 : index
    %256 = vector.load %arg4[%c2_128, %c0_129] : memref<7x16xf32, #tpu.memory_space<vmem>>, vector<1x16xf32>
    %cst_130 = arith.constant dense<0.000000e+00> : vector<1x256xf32>
    %257 = tpu.matmul %256, %255, %cst_130 {dimension_numbers = #tpu.dot_dimension_numbers<[1], [0], [0], [1], [0, 0, 1, 1], [], []>} : vector<1x16xf32>, vector<16x256xf32>, vector<1x256xf32> -> vector<1x256xf32>
    %c2_131 = arith.constant 2 : index
    %c0_132 = arith.constant 0 : index
    %258 = vector.load %arg6[%c2_131, %c0_132] : memref<7x256xf32, #tpu.memory_space<vmem>>, vector<1x256xf32>
    %259 = arith.mulf %257, %258 : vector<1x256xf32>
    %260 = arith.addf %254, %259 : vector<1x256xf32>
    %c0_i32_133 = arith.constant 0 : i32
    %261 = tpu.dynamic_rotate %240 by %c0_i32_133 dim 1 : vector<16x256xf32>, i32 -> vector<16x256xf32>
    %c3_134 = arith.constant 3 : index
    %c0_135 = arith.constant 0 : index
    %262 = vector.load %arg4[%c3_134, %c0_135] : memref<7x16xf32, #tpu.memory_space<vmem>>, vector<1x16xf32>
    %cst_136 = arith.constant dense<0.000000e+00> : vector<1x256xf32>
    %263 = tpu.matmul %262, %261, %cst_136 {dimension_numbers = #tpu.dot_dimension_numbers<[1], [0], [0], [1], [0, 0, 1, 1], [], []>} : vector<1x16xf32>, vector<16x256xf32>, vector<1x256xf32> -> vector<1x256xf32>
    %c3_137 = arith.constant 3 : index
    %c0_138 = arith.constant 0 : index
    %264 = vector.load %arg6[%c3_137, %c0_138] : memref<7x256xf32, #tpu.memory_space<vmem>>, vector<1x256xf32>
    %265 = arith.mulf %263, %264 : vector<1x256xf32>
    %266 = arith.addf %260, %265 : vector<1x256xf32>
    %c240_i32 = arith.constant 240 : i32
    %267 = tpu.dynamic_rotate %240 by %c240_i32 dim 1 : vector<16x256xf32>, i32 -> vector<16x256xf32>
    %c4_139 = arith.constant 4 : index
    %c0_140 = arith.constant 0 : index
    %268 = vector.load %arg4[%c4_139, %c0_140] : memref<7x16xf32, #tpu.memory_space<vmem>>, vector<1x16xf32>
    %cst_141 = arith.constant dense<0.000000e+00> : vector<1x256xf32>
    %269 = tpu.matmul %268, %267, %cst_141 {dimension_numbers = #tpu.dot_dimension_numbers<[1], [0], [0], [1], [0, 0, 1, 1], [], []>} : vector<1x16xf32>, vector<16x256xf32>, vector<1x256xf32> -> vector<1x256xf32>
    %c4_142 = arith.constant 4 : index
    %c0_143 = arith.constant 0 : index
    %270 = vector.load %arg6[%c4_142, %c0_143] : memref<7x256xf32, #tpu.memory_space<vmem>>, vector<1x256xf32>
    %271 = arith.mulf %269, %270 : vector<1x256xf32>
    %272 = arith.addf %266, %271 : vector<1x256xf32>
    %c224_i32 = arith.constant 224 : i32
    %273 = tpu.dynamic_rotate %240 by %c224_i32 dim 1 : vector<16x256xf32>, i32 -> vector<16x256xf32>
    %c5_144 = arith.constant 5 : index
    %c0_145 = arith.constant 0 : index
    %274 = vector.load %arg4[%c5_144, %c0_145] : memref<7x16xf32, #tpu.memory_space<vmem>>, vector<1x16xf32>
    %cst_146 = arith.constant dense<0.000000e+00> : vector<1x256xf32>
    %275 = tpu.matmul %274, %273, %cst_146 {dimension_numbers = #tpu.dot_dimension_numbers<[1], [0], [0], [1], [0, 0, 1, 1], [], []>} : vector<1x16xf32>, vector<16x256xf32>, vector<1x256xf32> -> vector<1x256xf32>
    %c5_147 = arith.constant 5 : index
    %c0_148 = arith.constant 0 : index
    %276 = vector.load %arg6[%c5_147, %c0_148] : memref<7x256xf32, #tpu.memory_space<vmem>>, vector<1x256xf32>
    %277 = arith.mulf %275, %276 : vector<1x256xf32>
    %278 = arith.addf %272, %277 : vector<1x256xf32>
    %c208_i32 = arith.constant 208 : i32
    %279 = tpu.dynamic_rotate %240 by %c208_i32 dim 1 : vector<16x256xf32>, i32 -> vector<16x256xf32>
    %c6_149 = arith.constant 6 : index
    %c0_150 = arith.constant 0 : index
    %280 = vector.load %arg4[%c6_149, %c0_150] : memref<7x16xf32, #tpu.memory_space<vmem>>, vector<1x16xf32>
    %cst_151 = arith.constant dense<0.000000e+00> : vector<1x256xf32>
    %281 = tpu.matmul %280, %279, %cst_151 {dimension_numbers = #tpu.dot_dimension_numbers<[1], [0], [0], [1], [0, 0, 1, 1], [], []>} : vector<1x16xf32>, vector<16x256xf32>, vector<1x256xf32> -> vector<1x256xf32>
    %c6_152 = arith.constant 6 : index
    %c0_153 = arith.constant 0 : index
    %282 = vector.load %arg6[%c6_152, %c0_153] : memref<7x256xf32, #tpu.memory_space<vmem>>, vector<1x256xf32>
    %283 = arith.mulf %281, %282 : vector<1x256xf32>
    %284 = arith.addf %278, %283 : vector<1x256xf32>
    %285 = arith.negf %284 : vector<1x256xf32>
    %286 = math.exp %285 : vector<1x256xf32>
    %cst_154 = arith.constant 1.000000e+00 : f32
    %287 = vector.broadcast %cst_154 : f32 to vector<1x256xf32>
    %288 = arith.addf %287, %286 : vector<1x256xf32>
    %289 = arith.divf %287, %288 : vector<1x256xf32>
    %c0_i32_155 = arith.constant 0 : i32
    %c8_i32_156 = arith.constant 8 : i32
    %290 = arith.muli %c0_i32_155, %c8_i32_156 : i32
    %291 = tpu.assume_multiple %290, 8 : i32
    %c0_157 = arith.constant 0 : index
    %292 = arith.index_cast %291 : i32 to index
    %c0_158 = arith.constant 0 : index
    %293 = vector.load %arg1[%c0_157, %292, %c0_158] : memref<1x32x256xf32, #tpu.memory_space<vmem>>, vector<1x8x256xf32>
    %294 = vector.shape_cast %293 : vector<1x8x256xf32> to vector<8x256xf32>
    %295 = arith.index_cast %291 : i32 to index
    %c0_159 = arith.constant 0 : index
    %296 = vector.load %arg9[%295, %c0_159] : memref<32x1xf32, #tpu.memory_space<vmem>>, vector<8x1xf32>
    %297 = vector.broadcast %296 : vector<8x1xf32> to vector<8x256xf32>
    %298 = arith.mulf %294, %297 : vector<8x256xf32>
    %299 = vector.broadcast %289 : vector<1x256xf32> to vector<8x256xf32>
    %300 = arith.mulf %298, %299 : vector<8x256xf32>
    %c0_160 = arith.constant 0 : index
    %301 = arith.index_cast %291 : i32 to index
    %c0_161 = arith.constant 0 : index
    %302 = vector.load %arg8[%c0_160, %301, %c0_161] : memref<1x32x256xf32, #tpu.memory_space<vmem>>, vector<1x8x256xf32>
    %303 = vector.shape_cast %302 : vector<1x8x256xf32> to vector<8x256xf32>
    %304 = vector.shape_cast %300 : vector<8x256xf32> to vector<1x8x256xf32>
    tpu.vector_store %arg8[%c0_160, %301, %c0_161], %304 {strides = array<i32>} : memref<1x32x256xf32, #tpu.memory_space<vmem>>, vector<1x8x256xf32>,
    %c1_i32_162 = arith.constant 1 : i32
    %c8_i32_163 = arith.constant 8 : i32
    %305 = arith.muli %c1_i32_162, %c8_i32_163 : i32
    %306 = tpu.assume_multiple %305, 8 : i32
    %c0_164 = arith.constant 0 : index
    %307 = arith.index_cast %306 : i32 to index
    %c0_165 = arith.constant 0 : index
    %308 = vector.load %arg1[%c0_164, %307, %c0_165] : memref<1x32x256xf32, #tpu.memory_space<vmem>>, vector<1x8x256xf32>
    %309 = vector.shape_cast %308 : vector<1x8x256xf32> to vector<8x256xf32>
    %310 = arith.index_cast %306 : i32 to index
    %c0_166 = arith.constant 0 : index
    %311 = vector.load %arg9[%310, %c0_166] : memref<32x1xf32, #tpu.memory_space<vmem>>, vector<8x1xf32>
    %312 = vector.broadcast %311 : vector<8x1xf32> to vector<8x256xf32>
    %313 = arith.mulf %309, %312 : vector<8x256xf32>
    %314 = vector.broadcast %289 : vector<1x256xf32> to vector<8x256xf32>
    %315 = arith.mulf %313, %314 : vector<8x256xf32>
    %c0_167 = arith.constant 0 : index
    %316 = arith.index_cast %306 : i32 to index
    %c0_168 = arith.constant 0 : index
    %317 = vector.load %arg8[%c0_167, %316, %c0_168] : memref<1x32x256xf32, #tpu.memory_space<vmem>>, vector<1x8x256xf32>
    %318 = vector.shape_cast %317 : vector<1x8x256xf32> to vector<8x256xf32>
    %319 = vector.shape_cast %315 : vector<8x256xf32> to vector<1x8x256xf32>
    tpu.vector_store %arg8[%c0_167, %316, %c0_168], %319 {strides = array<i32>} : memref<1x32x256xf32, #tpu.memory_space<vmem>>, vector<1x8x256xf32>,
    %c2_i32_169 = arith.constant 2 : i32
    %c8_i32_170 = arith.constant 8 : i32
    %320 = arith.muli %c2_i32_169, %c8_i32_170 : i32
    %321 = tpu.assume_multiple %320, 8 : i32
    %c0_171 = arith.constant 0 : index
    %322 = arith.index_cast %321 : i32 to index
    %c0_172 = arith.constant 0 : index
    %323 = vector.load %arg1[%c0_171, %322, %c0_172] : memref<1x32x256xf32, #tpu.memory_space<vmem>>, vector<1x8x256xf32>
    %324 = vector.shape_cast %323 : vector<1x8x256xf32> to vector<8x256xf32>
    %325 = arith.index_cast %321 : i32 to index
    %c0_173 = arith.constant 0 : index
    %326 = vector.load %arg9[%325, %c0_173] : memref<32x1xf32, #tpu.memory_space<vmem>>, vector<8x1xf32>
    %327 = vector.broadcast %326 : vector<8x1xf32> to vector<8x256xf32>
    %328 = arith.mulf %324, %327 : vector<8x256xf32>
    %329 = vector.broadcast %289 : vector<1x256xf32> to vector<8x256xf32>
    %330 = arith.mulf %328, %329 : vector<8x256xf32>
    %c0_174 = arith.constant 0 : index
    %331 = arith.index_cast %321 : i32 to index
    %c0_175 = arith.constant 0 : index
    %332 = vector.load %arg8[%c0_174, %331, %c0_175] : memref<1x32x256xf32, #tpu.memory_space<vmem>>, vector<1x8x256xf32>
    %333 = vector.shape_cast %332 : vector<1x8x256xf32> to vector<8x256xf32>
    %334 = vector.shape_cast %330 : vector<8x256xf32> to vector<1x8x256xf32>
    tpu.vector_store %arg8[%c0_174, %331, %c0_175], %334 {strides = array<i32>} : memref<1x32x256xf32, #tpu.memory_space<vmem>>, vector<1x8x256xf32>,
    %c3_i32_176 = arith.constant 3 : i32
    %c8_i32_177 = arith.constant 8 : i32
    %335 = arith.muli %c3_i32_176, %c8_i32_177 : i32
    %336 = tpu.assume_multiple %335, 8 : i32
    %c0_178 = arith.constant 0 : index
    %337 = arith.index_cast %336 : i32 to index
    %c0_179 = arith.constant 0 : index
    %338 = vector.load %arg1[%c0_178, %337, %c0_179] : memref<1x32x256xf32, #tpu.memory_space<vmem>>, vector<1x8x256xf32>
    %339 = vector.shape_cast %338 : vector<1x8x256xf32> to vector<8x256xf32>
    %340 = arith.index_cast %336 : i32 to index
    %c0_180 = arith.constant 0 : index
    %341 = vector.load %arg9[%340, %c0_180] : memref<32x1xf32, #tpu.memory_space<vmem>>, vector<8x1xf32>
    %342 = vector.broadcast %341 : vector<8x1xf32> to vector<8x256xf32>
    %343 = arith.mulf %339, %342 : vector<8x256xf32>
    %344 = vector.broadcast %289 : vector<1x256xf32> to vector<8x256xf32>
    %345 = arith.mulf %343, %344 : vector<8x256xf32>
    %c0_181 = arith.constant 0 : index
    %346 = arith.index_cast %336 : i32 to index
    %c0_182 = arith.constant 0 : index
    %347 = vector.load %arg8[%c0_181, %346, %c0_182] : memref<1x32x256xf32, #tpu.memory_space<vmem>>, vector<1x8x256xf32>
    %348 = vector.shape_cast %347 : vector<1x8x256xf32> to vector<8x256xf32>
    %349 = vector.shape_cast %345 : vector<8x256xf32> to vector<1x8x256xf32>
    tpu.vector_store %arg8[%c0_181, %346, %c0_182], %349 {strides = array<i32>} : memref<1x32x256xf32, #tpu.memory_space<vmem>>, vector<1x8x256xf32>,
    %c4_i32_183 = arith.constant 4 : i32
    return
  }
  func.func @transform_0(%arg0: i32) -> (i32, i32, i32) {
    %c0_i32 = arith.constant 0 : i32
    %c0_i32_0 = arith.constant 0 : i32
    %c0_i32_1 = arith.constant 0 : i32
    return %arg0, %c0_i32, %c0_i32_0 : i32, i32, i32
  }
  func.func @transform_1(%arg0: i32) -> (i32, i32) {
    %c0_i32 = arith.constant 0 : i32
    %c0_i32_0 = arith.constant 0 : i32
    %c0_i32_1 = arith.constant 0 : i32
    return %c0_i32, %c0_i32_0 : i32, i32
  }
  func.func @transform_2(%arg0: i32) -> (i32, i32) {
    %c0_i32 = arith.constant 0 : i32
    %c0_i32_0 = arith.constant 0 : i32
    %c0_i32_1 = arith.constant 0 : i32
    return %c0_i32, %c0_i32_0 : i32, i32
  }
  func.func @transform_3(%arg0: i32) -> (i32, i32) {
    %c0_i32 = arith.constant 0 : i32
    %c0_i32_0 = arith.constant 0 : i32
    %c0_i32_1 = arith.constant 0 : i32
    return %c0_i32, %c0_i32_0 : i32, i32
  }
  func.func @transform_4(%arg0: i32) -> (i32, i32) {
    %c0_i32 = arith.constant 0 : i32
    %c0_i32_0 = arith.constant 0 : i32
    %c0_i32_1 = arith.constant 0 : i32
    return %c0_i32, %c0_i32_0 : i32, i32
  }
  func.func @transform_5(%arg0: i32) -> (i32, i32) {
    %c0_i32 = arith.constant 0 : i32
    %c0_i32_0 = arith.constant 0 : i32
    %c0_i32_1 = arith.constant 0 : i32
    return %c0_i32, %c0_i32_0 : i32, i32
  }
  func.func @transform_6(%arg0: i32) -> i32 {
    %c0_i32 = arith.constant 0 : i32
    %c0_i32_0 = arith.constant 0 : i32
    return %c0_i32 : i32
  }
  func.func @transform_7(%arg0: i32) -> (i32, i32, i32) {
    %c0_i32 = arith.constant 0 : i32
    %c0_i32_0 = arith.constant 0 : i32
    %c0_i32_1 = arith.constant 0 : i32
    return %arg0, %c0_i32, %c0_i32_0 : i32, i32, i32
  }
}

</mosaic_0001>

<llo_original>
// kernel: tpu_custom_call.1
$region0: #{tpu_custom_call.1}
  #allocation0 [shape = 'u32[]', space=smem, size = 0x4, offset = 0x4, fixed_abs, tag = 'smem constant byte address 0x4 - core index']
  #allocation1 [shape = 'u32[144,128]{1,0:T(1,128)}', space=vmem, size = 0x12000, scoped, tag = 'internal scratch']
  #allocation2 [shape = 'f32[32,1]{1,0:T(8,128)}', space=vmem, size = 0x4000, scoped, tag = 'scratch operand']
  #allocation3 [shape = 'f32[8,256]{1,0:T(8,128)}', space=vmem, size = 0x2000, scoped, tag = 'scratch operand']
  #allocation4 [shape = 'f32[16,256]{1,0:T(8,128)}', space=vmem, size = 0x4000, scoped, tag = 'scratch operand']
  #allocation5 [shape = 'f32[1]{0:T(128)S(6)}', space=smem, size = 0x200, scoped, tag = 'scoped memory for tpu_custom_call.1']
  %s0 = inlined_call_operand.hbm [shape: f32[2,32,256], index: 0, kind: input, shape index: {}]
  %s1 = inlined_call_operand.vmem [shape: f32[32,2], index: 1, kind: input, shape index: {}]
  %s2 = inlined_call_operand.vmem [shape: f32[32,2], index: 2, kind: input, shape index: {}]
  %s3 = inlined_call_operand.vmem [shape: f32[7,16], index: 3, kind: input, shape index: {}]
  %s4 = inlined_call_operand.vmem [shape: f32[7,256], index: 4, kind: input, shape index: {}]
  %s5 = inlined_call_operand.vmem [shape: f32[7,256], index: 5, kind: input, shape index: {}]
  %s6 = inlined_call_operand.<no memory space> [shape: f32[1], index: 6, kind: input, shape index: {}]
  %s7 = inlined_call_operand.hbm [shape: f32[2,32,256], index: 7, kind: output, shape index: {}]
  %s8 = sld [smem:[#allocation0]]
  $region65: #{tpu_custom_call.1} parent=0
    _
  %s10 = ssub.s32 1, %s8
  %s11 = scalar_select 0, %s10, %s8
  %12 = sst [smem:[#allocation5]] %s6
  $region1: #{tpu_custom_call.1} parent=0
    #allocation6 [shape = 'u8[65536]{0}', space=vmem, size = 0x10000, scoped, tag = 'input window, operand 0']
    #allocation7 [shape = 's32[2]{0}', space=sflag, size = 0x8, scoped, tag = 'scoped memory for tpu_custom_call.1']
    #allocation8 [shape = 's32[2]{0}', space=sflag, size = 0x8, scoped, tag = 'scoped memory for tpu_custom_call.1']
    #allocation9 [shape = 'u8[65536]{0}', space=vmem, size = 0x10000, scoped, tag = 'output window, operand 0']
    %13 = vsyncpa [#allocation7], 0
    %s14 = scalar_lea.sflag [#allocation7], 1
    %15 = vsyncpa %s14, 0
    %16 = vsyncpa [#allocation8], 0
    %s17 = scalar_lea.sflag [#allocation8], 1
    %18 = vsyncpa %s17, 0
    loop: start=0, step=1, limit=4
    $region2: #{tpu_custom_call.1} parent=1 // loop_pre_header
      _
    $region3: #{tpu_custom_call.1} parent=1 // loop_header
      %s20 = sphi 0, %s24
      %p21 = scmp.ge.s32.totalorder %s20, 4
      %s30 = sphi 0, %s32
      %s33 = sphi 0, %s30
      %s34 = sphi 0, %s33
      %s50 = sphi 0, %s34
      %s54 = sphi 0, %s54
      %s56 = sphi 0, %s54
      %s57 = sphi 0, %s56
      %s71 = sphi 0, %s57
      %s75 = sphi 0, %s75
      %s77 = sphi 0, %s75
      %s78 = sphi 0, %s77
      %s92 = sphi 0, %s78
      %s96 = sphi 0, %s96
      %s98 = sphi 0, %s96
      %s99 = sphi 0, %s98
      %s113 = sphi 0, %s99
      %s117 = sphi 0, %s117
      %s119 = sphi 0, %s117
      %s120 = sphi 0, %s119
      %s134 = sphi 0, %s120
      %s138 = sphi 0, %s138
      %s140 = sphi 0, %s138
      %s141 = sphi 0, %s140
      %s155 = sphi 0, %s141
      %s159 = sphi 0, %s159
      %s161 = sphi 0, %s159
      %s162 = sphi 0, %s161
      %s176 = sphi 0, %s162
      %s182 = sphi 0, %s184
      %s185 = sphi 0, %s182
      %s186 = sphi 0, %s185
      %s202 = sphi 0, %s186
    $region4: #{tpu_custom_call.1} parent=1 // loop_header_branch
      %23 = sbr.rel (%p21) target = $region8
    $region5: #{tpu_custom_call.1} parent=1 // loop_body
      %s25 = ssub.s32 %s20, 1
      %s26 = ssub.s32 %s20, 2
      %s27 = sadd.s32 %s20, 1
      %s28 = ssub.s32 %s20, %s27
      %p29 = scmp.eq.s32.totalorder %s28, 0
      %s31 = sadd.s32 %s30, 1
      %s32 = scalar_select %p29, %s30, %s31
      %p35 = pneg %p29
      %p36 = scmp.eq.s32.totalorder %s20, 1
      %p37 = por %p35, %p36
      %p38 = scmp.ne.s32.totalorder %s30, %s33
      %p39 = scmp.eq.s32.totalorder %s20, 0
      %p40 = por %p38, %p39
      %p41 = scmp.ne.s32.totalorder %s30, %s33
      %p42 = scmp.eq.s32.totalorder %s25, 1
      %p43 = por %p41, %p42
      %p44 = scmp.ne.s32.totalorder %s33, %s34
      %p45 = scmp.eq.s32.totalorder %s25, 0
      %p46 = por %p44, %p45
      %p47 = scmp.ne.s32.totalorder %s33, %s34
      %p48 = scmp.eq.s32.totalorder %s26, 1
      %p49 = por %p47, %p48
      %p51 = scmp.ne.s32.totalorder %s34, %s50
      %p52 = scmp.eq.s32.totalorder %s26, 0
      %p53 = por %p51, %p52
      %s55 = sadd.s32 %s54, 1
      %p58 = scmp.eq.s32.totalorder %s20, 1
      %p59 = scmp.ne.s32.totalorder %s54, %s56
      %p60 = scmp.eq.s32.totalorder %s20, 0
      %p61 = por %p59, %p60
      %p62 = scmp.ne.s32.totalorder %s54, %s56
      %p63 = scmp.eq.s32.totalorder %s25, 1
      %p64 = por %p62, %p63
      %p65 = scmp.ne.s32.totalorder %s56, %s57
      %p66 = scmp.eq.s32.totalorder %s25, 0
      %p67 = por %p65, %p66
      %p68 = scmp.ne.s32.totalorder %s56, %s57
      %p69 = scmp.eq.s32.totalorder %s26, 1
      %p70 = por %p68, %p69
      %p72 = scmp.ne.s32.totalorder %s57, %s71
      %p73 = scmp.eq.s32.totalorder %s26, 0
      %p74 = por %p72, %p73
      %s76 = sadd.s32 %s75, 1
      %p79 = scmp.eq.s32.totalorder %s20, 1
      %p80 = scmp.ne.s32.totalorder %s75, %s77
      %p81 = scmp.eq.s32.totalorder %s20, 0
      %p82 = por %p80, %p81
      %p83 = scmp.ne.s32.totalorder %s75, %s77
      %p84 = scmp.eq.s32.totalorder %s25, 1
      %p85 = por %p83, %p84
      %p86 = scmp.ne.s32.totalorder %s77, %s78
      %p87 = scmp.eq.s32.totalorder %s25, 0
      %p88 = por %p86, %p87
      %p89 = scmp.ne.s32.totalorder %s77, %s78
      %p90 = scmp.eq.s32.totalorder %s26, 1
      %p91 = por %p89, %p90
      %p93 = scmp.ne.s32.totalorder %s78, %s92
      %p94 = scmp.eq.s32.totalorder %s26, 0
      %p95 = por %p93, %p94
      %s97 = sadd.s32 %s96, 1
      %p100 = scmp.eq.s32.totalorder %s20, 1
      %p101 = scmp.ne.s32.totalorder %s96, %s98
      %p102 = scmp.eq.s32.totalorder %s20, 0
      %p103 = por %p101, %p102
      %p104 = scmp.ne.s32.totalorder %s96, %s98
      %p105 = scmp.eq.s32.totalorder %s25, 1
      %p106 = por %p104, %p105
      %p107 = scmp.ne.s32.totalorder %s98, %s99
      %p108 = scmp.eq.s32.totalorder %s25, 0
      %p109 = por %p107, %p108
      %p110 = scmp.ne.s32.totalorder %s98, %s99
      %p111 = scmp.eq.s32.totalorder %s26, 1
      %p112 = por %p110, %p111
      %p114 = scmp.ne.s32.totalorder %s99, %s113
      %p115 = scmp.eq.s32.totalorder %s26, 0
      %p116 = por %p114, %p115
      %s118 = sadd.s32 %s117, 1
      %p121 = scmp.eq.s32.totalorder %s20, 1
      %p122 = scmp.ne.s32.totalorder %s117, %s119
      %p123 = scmp.eq.s32.totalorder %s20, 0
      %p124 = por %p122, %p123
      %p125 = scmp.ne.s32.totalorder %s117, %s119
      %p126 = scmp.eq.s32.totalorder %s25, 1
      %p127 = por %p125, %p126
      %p128 = scmp.ne.s32.totalorder %s119, %s120
      %p129 = scmp.eq.s32.totalorder %s25, 0
      %p130 = por %p128, %p129
      %p131 = scmp.ne.s32.totalorder %s119, %s120
      %p132 = scmp.eq.s32.totalorder %s26, 1
      %p133 = por %p131, %p132
      %p135 = scmp.ne.s32.totalorder %s120, %s134
      %p136 = scmp.eq.s32.totalorder %s26, 0
      %p137 = por %p135, %p136
      %s139 = sadd.s32 %s138, 1
      %p142 = scmp.eq.s32.totalorder %s20, 1
      %p143 = scmp.ne.s32.totalorder %s138, %s140
      %p144 = scmp.eq.s32.totalorder %s20, 0
      %p145 = por %p143, %p144
      %p146 = scmp.ne.s32.totalorder %s138, %s140
      %p147 = scmp.eq.s32.totalorder %s25, 1
      %p148 = por %p146, %p147
      %p149 = scmp.ne.s32.totalorder %s140, %s141
      %p150 = scmp.eq.s32.totalorder %s25, 0
      %p151 = por %p149, %p150
      %p152 = scmp.ne.s32.totalorder %s140, %s141
      %p153 = scmp.eq.s32.totalorder %s26, 1
      %p154 = por %p152, %p153
      %p156 = scmp.ne.s32.totalorder %s141, %s155
      %p157 = scmp.eq.s32.totalorder %s26, 0
      %p158 = por %p156, %p157
      %s160 = sadd.s32 %s159, 1
      %p163 = scmp.eq.s32.totalorder %s20, 1
      %p164 = scmp.ne.s32.totalorder %s159, %s161
      %p165 = scmp.eq.s32.totalorder %s20, 0
      %p166 = por %p164, %p165
      %p167 = scmp.ne.s32.totalorder %s159, %s161
      %p168 = scmp.eq.s32.totalorder %s25, 1
      %p169 = por %p167, %p168
      %p170 = scmp.ne.s32.totalorder %s161, %s162
      %p171 = scmp.eq.s32.totalorder %s25, 0
      %p172 = por %p170, %p171
      %p173 = scmp.ne.s32.totalorder %s161, %s162
      %p174 = scmp.eq.s32.totalorder %s26, 1
      %p175 = por %p173, %p174
      %p177 = scmp.ne.s32.totalorder %s162, %s176
      %p178 = scmp.eq.s32.totalorder %s26, 0
      %p179 = por %p177, %p178
      %s180 = ssub.s32 %s20, %s27
      %p181 = scmp.eq.s32.totalorder %s180, 0
      %s183 = sadd.s32 %s182, 1
      %s184 = scalar_select %p181, %s182, %s183
      %p187 = pneg %p181
      %p188 = scmp.eq.s32.totalorder %s20, 1
      %p189 = por %p187, %p188
      %p190 = scmp.ne.s32.totalorder %s182, %s185
      %p191 = scmp.eq.s32.totalorder %s20, 0
      %p192 = por %p190, %p191
      %p193 = scmp.ne.s32.totalorder %s182, %s185
      %p194 = scmp.eq.s32.totalorder %s25, 1
      %p195 = por %p193, %p194
      %p196 = scmp.ne.s32.totalorder %s185, %s186
      %p197 = scmp.eq.s32.totalorder %s25, 0
      %p198 = por %p196, %p197
      %p199 = scmp.ne.s32.totalorder %s185, %s186
      %p200 = scmp.eq.s32.totalorder %s26, 1
      %p201 = por %p199, %p200
      %p203 = scmp.ne.s32.totalorder %s186, %s202
      %p204 = scmp.eq.s32.totalorder %s26, 0
      %p205 = por %p203, %p204
      %p206 = scmp.le.s32.totalorder 1, %s20
      %p207 = scmp.lt.s32.totalorder %s20, 3
      %p208 = pnand %p206, %p207
      %p209 = pneg %p208
      // Predicated region
      $region9: #{tpu_custom_call.1} parent=5 // pred_check
        _
      $region10: #{tpu_custom_call.1} parent=5 // pred_check_branch
        %211 = sbr.rel (%p208) target = $region12
      $region11: #{tpu_custom_call.1} parent=5 // pred_region
        %s212 = ssub.s32 %s20, 1
        // Predicated region
        $region13: #{tpu_custom_call.1} parent=11 // pred_check
          %p213 = pneg %p67
        $region14: #{tpu_custom_call.1} parent=11 // pred_check_branch
          %215 = sbr.rel (%p213) target = $region16
        $region15: #{tpu_custom_call.1} parent=11 // pred_region
          _
        $region16: #{tpu_custom_call.1} parent=11 // pred_fallthru
          _
        // Predicated region
        $region17: #{tpu_custom_call.1} parent=11 // pred_check
          %p216 = pneg %p88
        $region18: #{tpu_custom_call.1} parent=11 // pred_check_branch
          %218 = sbr.rel (%p216) target = $region20
        $region19: #{tpu_custom_call.1} parent=11 // pred_region
          _
        $region20: #{tpu_custom_call.1} parent=11 // pred_fallthru
          _
        // Predicated region
        $region21: #{tpu_custom_call.1} parent=11 // pred_check
          %p219 = pneg %p109
        $region22: #{tpu_custom_call.1} parent=11 // pred_check_branch
          %221 = sbr.rel (%p219) target = $region24
        $region23: #{tpu_custom_call.1} parent=11 // pred_region
          _
        $region24: #{tpu_custom_call.1} parent=11 // pred_fallthru
          _
        // Predicated region
        $region25: #{tpu_custom_call.1} parent=11 // pred_check
          %p222 = pneg %p130
        $region26: #{tpu_custom_call.1} parent=11 // pred_check_branch
          %224 = sbr.rel (%p222) target = $region28
        $region27: #{tpu_custom_call.1} parent=11 // pred_region
          _
        $region28: #{tpu_custom_call.1} parent=11 // pred_fallthru
          _
        // Predicated region
        $region29: #{tpu_custom_call.1} parent=11 // pred_check
          %p225 = pneg %p151
        $region30: #{tpu_custom_call.1} parent=11 // pred_check_branch
          %227 = sbr.rel (%p225) target = $region32
        $region31: #{tpu_custom_call.1} parent=11 // pred_region
          _
        $region32: #{tpu_custom_call.1} parent=11 // pred_fallthru
          _
        // Predicated region
        $region33: #{tpu_custom_call.1} parent=11 // pred_check
          %p228 = pneg %p172
        $region34: #{tpu_custom_call.1} parent=11 // pred_check_branch
          %230 = sbr.rel (%p228) target = $region36
        $region35: #{tpu_custom_call.1} parent=11 // pred_region
          _
        $region36: #{tpu_custom_call.1} parent=11 // pred_fallthru
          _
      $region12: #{tpu_custom_call.1} parent=5 // pred_fallthru
        _
      %p231 = scmp.lt.s32.totalorder %s20, 2
      // Predicated region
      $region37: #{tpu_custom_call.1} parent=5 // pred_check
        %p232 = pneg %p231
      $region38: #{tpu_custom_call.1} parent=5 // pred_check_branch
        %234 = sbr.rel (%p232) target = $region40
      $region39: #{tpu_custom_call.1} parent=5 // pred_region
        // Predicated region
        $region41: #{tpu_custom_call.1} parent=39 // pred_check
          %p235 = pneg %p40
        $region42: #{tpu_custom_call.1} parent=39 // pred_check_branch
          %237 = sbr.rel (%p235) target = $region44
        $region43: #{tpu_custom_call.1} parent=39 // pred_region
          %s238 = sand.u32 %s30, 1
          %s239 = scalar_lea.sflag [#allocation7], %s238
          %s240 = sand.u32 %s30, 1
          %s241 = smul.addr %s240, 64
          %s242 = scalar_lea.vmem [#allocation6], %s241
          %s244 = ssub.s32 1024, 1024
          %245 = vsyncadd %s239, %s244
          %s246 = smul.addr %s20, 8
          %s247 = smul.addr %s246, 128
          %s248 = scalar_lea.hbm %s0, %s247
          %s249 = sshll.u32 %s242, 4
          %s250 = int_to_ptr.vmem [resolvable:$true] %s249
          %255 = dma.hbm_to_vmem [thread:$0]  %s248, 1024, %s250, %s239, 256, 256, 16
        $region44: #{tpu_custom_call.1} parent=39 // pred_fallthru
          _
      $region40: #{tpu_custom_call.1} parent=5 // pred_fallthru
        _
      %p256 = scmp.le.s32.totalorder 1, %s20
      %p257 = scmp.lt.s32.totalorder %s20, 3
      %p258 = pnand %p256, %p257
      %p259 = pneg %p258
      // Predicated region
      $region45: #{tpu_custom_call.1} parent=5 // pred_check
        _
      $region46: #{tpu_custom_call.1} parent=5 // pred_check_branch
        %261 = sbr.rel (%p258) target = $region48
      $region47: #{tpu_custom_call.1} parent=5 // pred_region
        %s262 = ssub.s32 %s20, 1
        %s263 = sand.u32 %s33, 1
        %s264 = scalar_lea.sflag [#allocation7], %s263
        %s265 = sand.u32 %s33, 1
        %s266 = smul.addr %s265, 64
        %s267 = scalar_lea.vmem [#allocation6], %s266
        // Predicated region
        $region49: #{tpu_custom_call.1} parent=47 // pred_check
          %p268 = pneg %p46
        $region50: #{tpu_custom_call.1} parent=47 // pred_check_branch
          %270 = sbr.rel (%p268) target = $region52
        $region51: #{tpu_custom_call.1} parent=47 // pred_region
          %271 = dma.done %s264, 1024
        $region52: #{tpu_custom_call.1} parent=47 // pred_fallthru
          _
        %s272 = sand.u32 %s33, 1
        %s273 = scalar_lea.sflag [#allocation7], %s272
        %s274 = sand.u32 %s33, 1
        %s275 = smul.addr %s274, 64
        %s276 = scalar_lea.vmem [#allocation6], %s275
        %p277 = pneg %p46
        %p278 = pneg %p43
        %p279 = pneg %p67
        %p280 = pneg %p64
        %p281 = pneg %p88
        %p282 = pneg %p85
        %p283 = pneg %p109
        %p284 = pneg %p106
        %p285 = pneg %p130
        %p286 = pneg %p127
        %p287 = pneg %p151
        %p288 = pneg %p148
        %p289 = pneg %p172
        %p290 = pneg %p169
        %p291 = pneg %p198
        %p292 = pneg %p195
        %s293 = sand.u32 %s185, 1
        %s294 = scalar_lea.sflag [#allocation8], %s293
        %s295 = sand.u32 %s185, 1
        %s296 = smul.addr %s295, 64
        %s297 = scalar_lea.vmem [#allocation9], %s296
        %298 = vst [vmem:[#allocation4 + $0x10] sm:$0xc0] 0.0
        %299 = vst [vmem:[#allocation4 + $0x18] sm:$0xc0] 0.0
        %300 = vst [vmem:[#allocation3] sm:$0xfc] 0.0
        %301 = vst [vmem:[#allocation3 + $0x8] sm:$0xfc] 0.0
        %s302 = smul.u32 0, 2
        %s303 = smul.addr %s302, 8
        %s304 = scalar_lea.vmem %s267, %s303 [#allocation6]
        %v305 = vld [vmem:[%s304] sm:$0xff]
        %v306 = vld [vmem:[%s304 + $0x8] sm:$0xff]
        %v307 = vadd.f32 %v305, %v306
        %308 = vadd.xlane.f32.xlu0 %v307
        %v309 = vpop.xlane.xlu0 %308
        %v310 = vmul.f32 %v309, 0.00390625
        %v311 = vld [vmem:[%s1] sm:$0xff]
        %v312 = vmul.f32 %v311, %v310
        %vm313 = vcmask 15360
        %v314 = vsel %vm313, %v312, 0.0
        %v315 = vrot.slane %v314, 4
        %v316 = vadd.f32 %v314, %v315
        %v317 = vrot.slane %v316, 2
        %v318 = vadd.f32 %v316, %v317
        %v319 = vrot.slane %v318, 1
        %v320 = vadd.f32 %v318, %v319
        %v321 = vadd.f32 %v320, 0.0
        %s322 = smul.u32 1, 2
        %s323 = smul.addr %s322, 8
        %s324 = scalar_lea.vmem %s267, %s323 [#allocation6]
        %v325 = vld [vmem:[%s324] sm:$0xff]
        %v326 = vld [vmem:[%s324 + $0x8] sm:$0xff]
        %v327 = vadd.f32 %v325, %v326
        %328 = vadd.xlane.f32.xlu0 %v327
        %v329 = vpop.xlane.xlu0 %328
        %v330 = vmul.f32 %v329, 0.00390625
        %s331 = scalar_lea.vmem %s1, 8
        %v332 = vld [vmem:[%s331] sm:$0xff]
        %v333 = vmul.f32 %v332, %v330
        %v334 = vsel %vm313, %v333, 0.0
        %v335 = vrot.slane %v334, 4
        %v336 = vadd.f32 %v334, %v335
        %v337 = vrot.slane %v336, 2
        %v338 = vadd.f32 %v336, %v337
        %v339 = vrot.slane %v338, 1
        %v340 = vadd.f32 %v338, %v339
        %v341 = vadd.f32 %v321, %v340
        %s342 = smul.u32 2, 2
        %s343 = smul.addr %s342, 8
        %s344 = scalar_lea.vmem %s267, %s343 [#allocation6]
        %v345 = vld [vmem:[%s344] sm:$0xff]
        %v346 = vld [vmem:[%s344 + $0x8] sm:$0xff]
        %v347 = vadd.f32 %v345, %v346
        %348 = vadd.xlane.f32.xlu0 %v347
        %v349 = vpop.xlane.xlu0 %348
        %v350 = vmul.f32 %v349, 0.00390625
        %s351 = scalar_lea.vmem %s1, 16
        %v352 = vld [vmem:[%s351] sm:$0xff]
        %v353 = vmul.f32 %v352, %v350
        %v354 = vsel %vm313, %v353, 0.0
        %v355 = vrot.slane %v354, 4
        %v356 = vadd.f32 %v354, %v355
        %v357 = vrot.slane %v356, 2
        %v358 = vadd.f32 %v356, %v357
        %v359 = vrot.slane %v358, 1
        %v360 = vadd.f32 %v358, %v359
        %v361 = vadd.f32 %v341, %v360
        %s362 = smul.u32 3, 2
        %s363 = smul.addr %s362, 8
        %s364 = scalar_lea.vmem %s267, %s363 [#allocation6]
        %v365 = vld [vmem:[%s364] sm:$0xff]
        %v366 = vld [vmem:[%s364 + $0x8] sm:$0xff]
        %v367 = vadd.f32 %v365, %v366
        %368 = vadd.xlane.f32.xlu0 %v367
        %v369 = vpop.xlane.xlu0 %368
        %v370 = vmul.f32 %v369, 0.00390625
        %s371 = scalar_lea.vmem %s1, 24
        %v372 = vld [vmem:[%s371] sm:$0xff]
        %v373 = vmul.f32 %v372, %v370
        %v374 = vsel %vm313, %v373, 0.0
        %v375 = vrot.slane %v374, 4
        %v376 = vadd.f32 %v374, %v375
        %v377 = vrot.slane %v376, 2
        %v378 = vadd.f32 %v376, %v377
        %v379 = vrot.slane %v378, 1
        %v380 = vadd.f32 %v378, %v379
        %v381 = vadd.f32 %v361, %v380
        %v382 = vmax.f32 %v381, 0.0
        %v383 = vld [vmem:[%s2] sm:$0xff]
        %v384 = vmul.f32 %v383, %v382
        %v385 = vsel %vm313, %v384, 0.0
        %386 = vadd.xlane.f32.xlu0 %v385
        %v387 = vpop.xlane.xlu0 %386
        %v388 = vxor.u32 %v387, 2147483648
        %v389 = vmul.f32 %v388, 1.442695
        %v390 = vpow.pop %v389
        %v391 = vadd.f32 %v390, 1.0
        %v392 = vrcp.pop %v391
        %v393 = vmul.f32 1.0, %v392
        %vm394 = vcmask 7168
        %395 = vst.msk [vmem:[#allocation2] sm:$0xff] %vm394, %v393
        %s396 = scalar_lea.vmem %s2, 8
        %v397 = vld [vmem:[%s396] sm:$0xff]
        %v398 = vmul.f32 %v397, %v382
        %v399 = vsel %vm313, %v398, 0.0
        %400 = vadd.xlane.f32.xlu0 %v399
        %v401 = vpop.xlane.xlu0 %400
        %v402 = vxor.u32 %v401, 2147483648
        %v403 = vmul.f32 %v402, 1.442695
        %v404 = vpow.pop %v403
        %v405 = vadd.f32 %v404, 1.0
        %v406 = vrcp.pop %v405
        %v407 = vmul.f32 1.0, %v406
        %s408 = scalar_lea.vmem [#allocation2], 8
        %409 = vst.msk [vmem:[%s408] sm:$0xff] %vm394, %v407
        %s410 = scalar_lea.vmem %s2, 16
        %v411 = vld [vmem:[%s410] sm:$0xff]
        %v412 = vmul.f32 %v411, %v382
        %v413 = vsel %vm313, %v412, 0.0
        %414 = vadd.xlane.f32.xlu0 %v413
        %v415 = vpop.xlane.xlu0 %414
        %v416 = vxor.u32 %v415, 2147483648
        %v417 = vmul.f32 %v416, 1.442695
        %v418 = vpow.pop %v417
        %v419 = vadd.f32 %v418, 1.0
        %v420 = vrcp.pop %v419
        %v421 = vmul.f32 1.0, %v420
        %s422 = scalar_lea.vmem [#allocation2], 16
        %423 = vst.msk [vmem:[%s422] sm:$0xff] %vm394, %v421
        %s424 = scalar_lea.vmem %s2, 24
        %v425 = vld [vmem:[%s424] sm:$0xff]
        %v426 = vmul.f32 %v425, %v382
        %v427 = vsel %vm313, %v426, 0.0
        %428 = vadd.xlane.f32.xlu0 %v427
        %v429 = vpop.xlane.xlu0 %428
        %v430 = vxor.u32 %v429, 2147483648
        %v431 = vmul.f32 %v430, 1.442695
        %v432 = vpow.pop %v431
        %v433 = vadd.f32 %v432, 1.0
        %v434 = vrcp.pop %v433
        %v435 = vmul.f32 1.0, %v434
        %s436 = scalar_lea.vmem [#allocation2], 24
        %437 = vst.msk [vmem:[%s436] sm:$0xff] %vm394, %v435
        %v438 = vld [vmem:[%s304] sm:$0xff]
        %v439 = vld [vmem:[%s304 + $0x8] sm:$0xff]
        %v440 = vld [vmem:[#allocation2] sm:$0xff]
        %442 = vset.pattern.permute.xlu0 0
        %443 = vperm.xlu0 %442, %v440
        %v444 = vpop.permute.xlu0 %443
        %v446 = vmul.f32 %v438, %v444
        %v447 = vmul.f32 %v439, %v444
        %v448 = vrot.slane %v446, 4
        %v449 = vadd.f32 %v446, %v448
        %v450 = vrot.slane %v449, 2
        %v451 = vadd.f32 %v449, %v450
        %v452 = vrot.slane %v451, 1
        %v453 = vadd.f32 %v451, %v452
        %v454 = vrot.slane %v447, 4
        %v455 = vadd.f32 %v447, %v454
        %v456 = vrot.slane %v455, 2
        %v457 = vadd.f32 %v455, %v456
        %v458 = vrot.slane %v457, 1
        %v459 = vadd.f32 %v457, %v458
        %v460 = vadd.f32 %v453, 0.0
        %v461 = vadd.f32 %v459, 0.0
        %v462 = vrot.slane %v446, 4
        %v463 = vmax.f32 %v446, %v462
        %v464 = vrot.slane %v463, 2
        %v465 = vmax.f32 %v463, %v464
        %v466 = vrot.slane %v465, 1
        %v467 = vmax.f32 %v465, %v466
        %v468 = vrot.slane %v447, 4
        %v469 = vmax.f32 %v447, %v468
        %v470 = vrot.slane %v469, 2
        %v471 = vmax.f32 %v469, %v470
        %v472 = vrot.slane %v471, 1
        %v473 = vmax.f32 %v471, %v472
        %v474 = vld [vmem:[%s324] sm:$0xff]
        %v475 = vld [vmem:[%s324 + $0x8] sm:$0xff]
        %v476 = vld [vmem:[%s408] sm:$0xff]
        %478 = vset.pattern.permute.xlu0 0
        %479 = vperm.xlu0 %478, %v476
        %v480 = vpop.permute.xlu0 %479
        %v482 = vmul.f32 %v474, %v480
        %v483 = vmul.f32 %v475, %v480
        %v484 = vrot.slane %v482, 4
        %v485 = vadd.f32 %v482, %v484
        %v486 = vrot.slane %v485, 2
        %v487 = vadd.f32 %v485, %v486
        %v488 = vrot.slane %v487, 1
        %v489 = vadd.f32 %v487, %v488
        %v490 = vrot.slane %v483, 4
        %v491 = vadd.f32 %v483, %v490
        %v492 = vrot.slane %v491, 2
        %v493 = vadd.f32 %v491, %v492
        %v494 = vrot.slane %v493, 1
        %v495 = vadd.f32 %v493, %v494
        %v496 = vadd.f32 %v460, %v489
        %v497 = vadd.f32 %v461, %v495
        %v498 = vrot.slane %v482, 4
        %v499 = vmax.f32 %v482, %v498
        %v500 = vrot.slane %v499, 2
        %v501 = vmax.f32 %v499, %v500
        %v502 = vrot.slane %v501, 1
        %v503 = vmax.f32 %v501, %v502
        %v504 = vrot.slane %v483, 4
        %v505 = vmax.f32 %v483, %v504
        %v506 = vrot.slane %v505, 2
        %v507 = vmax.f32 %v505, %v506
        %v508 = vrot.slane %v507, 1
        %v509 = vmax.f32 %v507, %v508
        %v510 = vmax.f32 %v467, %v503
        %v511 = vmax.f32 %v473, %v509
        %v512 = vld [vmem:[%s344] sm:$0xff]
        %v513 = vld [vmem:[%s344 + $0x8] sm:$0xff]
        %v514 = vld [vmem:[%s422] sm:$0xff]
        %516 = vset.pattern.permute.xlu0 0
        %517 = vperm.xlu0 %516, %v514
        %v518 = vpop.permute.xlu0 %517
        %v520 = vmul.f32 %v512, %v518
        %v521 = vmul.f32 %v513, %v518
        %v522 = vrot.slane %v520, 4
        %v523 = vadd.f32 %v520, %v522
        %v524 = vrot.slane %v523, 2
        %v525 = vadd.f32 %v523, %v524
        %v526 = vrot.slane %v525, 1
        %v527 = vadd.f32 %v525, %v526
        %v528 = vrot.slane %v521, 4
        %v529 = vadd.f32 %v521, %v528
        %v530 = vrot.slane %v529, 2
        %v531 = vadd.f32 %v529, %v530
        %v532 = vrot.slane %v531, 1
        %v533 = vadd.f32 %v531, %v532
        %v534 = vadd.f32 %v496, %v527
        %v535 = vadd.f32 %v497, %v533
        %v536 = vrot.slane %v520, 4
        %v537 = vmax.f32 %v520, %v536
        %v538 = vrot.slane %v537, 2
        %v539 = vmax.f32 %v537, %v538
        %v540 = vrot.slane %v539, 1
        %v541 = vmax.f32 %v539, %v540
        %v542 = vrot.slane %v521, 4
        %v543 = vmax.f32 %v521, %v542
        %v544 = vrot.slane %v543, 2
        %v545 = vmax.f32 %v543, %v544
        %v546 = vrot.slane %v545, 1
        %v547 = vmax.f32 %v545, %v546
        %v548 = vmax.f32 %v510, %v541
        %v549 = vmax.f32 %v511, %v547
        %v550 = vld [vmem:[%s364] sm:$0xff]
        %v551 = vld [vmem:[%s364 + $0x8] sm:$0xff]
        %v552 = vld [vmem:[%s436] sm:$0xff]
        %554 = vset.pattern.permute.xlu0 0
        %555 = vperm.xlu0 %554, %v552
        %v556 = vpop.permute.xlu0 %555
        %v558 = vmul.f32 %v550, %v556
        %v559 = vmul.f32 %v551, %v556
        %v560 = vrot.slane %v558, 4
        %v561 = vadd.f32 %v558, %v560
        %v562 = vrot.slane %v561, 2
        %v563 = vadd.f32 %v561, %v562
        %v564 = vrot.slane %v563, 1
        %v565 = vadd.f32 %v563, %v564
        %v566 = vrot.slane %v559, 4
        %v567 = vadd.f32 %v559, %v566
        %v568 = vrot.slane %v567, 2
        %v569 = vadd.f32 %v567, %v568
        %v570 = vrot.slane %v569, 1
        %v571 = vadd.f32 %v569, %v570
        %v572 = vadd.f32 %v534, %v565
        %v573 = vadd.f32 %v535, %v571
        %v574 = vrot.slane %v558, 4
        %v575 = vmax.f32 %v558, %v574
        %v576 = vrot.slane %v575, 2
        %v577 = vmax.f32 %v575, %v576
        %v578 = vrot.slane %v577, 1
        %v579 = vmax.f32 %v577, %v578
        %v580 = vrot.slane %v559, 4
        %v581 = vmax.f32 %v559, %v580
        %v582 = vrot.slane %v581, 2
        %v583 = vmax.f32 %v581, %v582
        %v584 = vrot.slane %v583, 1
        %v585 = vmax.f32 %v583, %v584
        %v586 = vmax.f32 %v548, %v579
        %v587 = vmax.f32 %v549, %v585
        %v588 = vmul.f32 %v572, 0.03125
        %v589 = vmul.f32 %v573, 0.03125
        %v592 = vcombine.low %v588, %v589
        %v594 = vunpack.c.l.s4 1966171168
        %v595 = vunpack.c.0.s8 %v594
        %v596 = vlaneseq
        %v597 = vshrl.u32 %v596, 7
        %v598 = vsub.s32 %v595, %v597
        %v599 = vrot.slane %v592, %v598
        %v601 = vunpack.c.l.s4 1966171168
        %v602 = vunpack.c.0.s8 %v601
        %v603 = vlaneseq
        %v604 = vshrl.u32 %v603, 7
        %v605 = vsub.s32 %v602, %v604
        %v606 = vrot.slane %v599, %v605
        %v608 = vlaneseq
        %vm609 = vcmp.ge.s32.totalorder %v608, 0
        %vm610 = vcmp.lt.s32.totalorder %v608, 256
        %vm611 = vmand %vm609, %vm610
        %612 = vst.msk [vmem:[#allocation3] ss:$8 sm:$0x3] %vm611, %v606
        %613 = vst.msk [vmem:[#allocation3] ss:$8 sm:$0x0] %vm611, %v606
        %v616 = vcombine.low %v586, %v587
        %v618 = vunpack.c.l.s4 1966171168
        %v619 = vunpack.c.0.s8 %v618
        %v620 = vlaneseq
        %v621 = vshrl.u32 %v620, 7
        %v622 = vsub.s32 %v619, %v621
        %v623 = vrot.slane %v616, %v622
        %v625 = vunpack.c.l.s4 1966171168
        %v626 = vunpack.c.0.s8 %v625
        %v627 = vlaneseq
        %v628 = vshrl.u32 %v627, 7
        %v629 = vsub.s32 %v626, %v628
        %v630 = vrot.slane %v623, %v629
        %s632 = scalar_lea.vmem [#allocation3], 1
        %633 = vst.msk [vmem:[%s632] ss:$8 sm:$0x3] %vm611, %v630
        %634 = vst.msk [vmem:[%s632] ss:$8 sm:$0x0] %vm611, %v630
        %v635 = vld [vmem:[#allocation3] sm:$0xff]
        %v636 = vld [vmem:[#allocation3 + $0x8] sm:$0xff]
        %637 = vrot.lane.b32.xlu0 %v635, 3
        %v638 = vpop.permute.xlu0 %637
        %639 = vrot.lane.b32.xlu0 %v636, 3
        %v640 = vpop.permute.xlu0 %639
        %v641 = vlaneseq
        %v642 = vand.u32 %v641, 127
        %vm643 = vcmp.lt.s32.totalorder %v642, 3
        %v644 = vsel %vm643, %v638, %v640
        %v645 = vsel %vm643, %v640, %v638
        %v646 = vld [vmem:[%s4] ss:$8 sm:$0x3]
        %v648 = vlaneseq
        %v649 = vshrl.u32 %v648, 7
        %v650 = vsub.s32 0, %v649
        %v651 = vrot.slane %v646, %v650
        %v652 = vlaneseq
        %v653 = vshrl.u32 %v652, 7
        %v654 = vsub.s32 1, %v653
        %v655 = vrot.slane %v646, %v654
        %v658 = vmul.f32 %v645, %v651
        %v659 = vmul.f32 %v644, %v655
        %660 = vst [vmem:[#allocation4] sm:$0x3] %v658
        %661 = vst [vmem:[#allocation4 + $0x8] sm:$0x3] %v659
        %662 = vrot.lane.b32.xlu0 %v635, 2
        %v663 = vpop.permute.xlu0 %662
        %664 = vrot.lane.b32.xlu0 %v636, 2
        %v665 = vpop.permute.xlu0 %664
        %vm666 = vcmp.lt.s32.totalorder %v642, 2
        %v667 = vsel %vm666, %v663, %v665
        %v668 = vsel %vm666, %v665, %v663
        %s669 = scalar_lea.vmem %s4, 1
        %v670 = vld [vmem:[%s669] ss:$8 sm:$0x3]
        %v672 = vlaneseq
        %v673 = vshrl.u32 %v672, 7
        %v674 = vsub.s32 0, %v673
        %v675 = vrot.slane %v670, %v674
        %v676 = vlaneseq
        %v677 = vshrl.u32 %v676, 7
        %v678 = vsub.s32 1, %v677
        %v679 = vrot.slane %v670, %v678
        %v682 = vmul.f32 %v668, %v675
        %v683 = vmul.f32 %v667, %v679
        %v686 = vrot.slane %v682, 6
        %v687 = vrot.slane %v683, 6
        %690 = vst [vmem:[#allocation4] sm:$0xc] %v686
        %691 = vst [vmem:[#allocation4 + $0x8] sm:$0xc] %v687
        %692 = vrot.lane.b32.xlu0 %v635, 1
        %v693 = vpop.permute.xlu0 %692
        %694 = vrot.lane.b32.xlu0 %v636, 1
        %v695 = vpop.permute.xlu0 %694
        %vm696 = vcmp.lt.s32.totalorder %v642, 1
        %v697 = vsel %vm696, %v693, %v695
        %v698 = vsel %vm696, %v695, %v693
        %s699 = scalar_lea.vmem %s4, 2
        %v700 = vld [vmem:[%s699] ss:$8 sm:$0x3]
        %v702 = vlaneseq
        %v703 = vshrl.u32 %v702, 7
        %v704 = vsub.s32 0, %v703
        %v705 = vrot.slane %v700, %v704
        %v706 = vlaneseq
        %v707 = vshrl.u32 %v706, 7
        %v708 = vsub.s32 1, %v707
        %v709 = vrot.slane %v700, %v708
        %v712 = vmul.f32 %v698, %v705
        %v713 = vmul.f32 %v697, %v709
        %v716 = vrot.slane %v712, 4
        %v717 = vrot.slane %v713, 4
        %720 = vst [vmem:[#allocation4] sm:$0x30] %v716
        %721 = vst [vmem:[#allocation4 + $0x8] sm:$0x30] %v717
        %s722 = scalar_lea.vmem %s4, 3
        %v723 = vld [vmem:[%s722] ss:$8 sm:$0x3]
        %v725 = vlaneseq
        %v726 = vshrl.u32 %v725, 7
        %v727 = vsub.s32 0, %v726
        %v728 = vrot.slane %v723, %v727
        %v729 = vlaneseq
        %v730 = vshrl.u32 %v729, 7
        %v731 = vsub.s32 1, %v730
        %v732 = vrot.slane %v723, %v731
        %v735 = vmul.f32 %v635, %v728
        %v736 = vmul.f32 %v636, %v732
        %v739 = vrot.slane %v735, 2
        %v740 = vrot.slane %v736, 2
        %743 = vst [vmem:[#allocation4] sm:$0xc0] %v739
        %744 = vst [vmem:[#allocation4 + $0x8] sm:$0xc0] %v740
        %745 = vrot.lane.b32.xlu0 %v635, 127
        %v746 = vpop.permute.xlu0 %745
        %747 = vrot.lane.b32.xlu0 %v636, 127
        %v748 = vpop.permute.xlu0 %747
        %vm749 = vcmp.lt.s32.totalorder %v642, 127
        %v750 = vsel %vm749, %v746, %v748
        %v751 = vsel %vm749, %v748, %v746
        %s752 = scalar_lea.vmem %s4, 4
        %v753 = vld [vmem:[%s752] ss:$8 sm:$0x3]
        %v755 = vlaneseq
        %v756 = vshrl.u32 %v755, 7
        %v757 = vsub.s32 0, %v756
        %v758 = vrot.slane %v753, %v757
        %v759 = vlaneseq
        %v760 = vshrl.u32 %v759, 7
        %v761 = vsub.s32 1, %v760
        %v762 = vrot.slane %v753, %v761
        %v765 = vmul.f32 %v750, %v758
        %v766 = vmul.f32 %v751, %v762
        %767 = vst [vmem:[#allocation4 + $0x10] sm:$0x3] %v765
        %768 = vst [vmem:[#allocation4 + $0x18] sm:$0x3] %v766
        %769 = vrot.lane.b32.xlu0 %v635, 126
        %v770 = vpop.permute.xlu0 %769
        %771 = vrot.lane.b32.xlu0 %v636, 126
        %v772 = vpop.permute.xlu0 %771
        %vm773 = vcmp.lt.s32.totalorder %v642, 126
        %v774 = vsel %vm773, %v770, %v772
        %v775 = vsel %vm773, %v772, %v770
        %s776 = scalar_lea.vmem %s4, 5
        %v777 = vld [vmem:[%s776] ss:$8 sm:$0x3]
        %v779 = vlaneseq
        %v780 = vshrl.u32 %v779, 7
        %v781 = vsub.s32 0, %v780
        %v782 = vrot.slane %v777, %v781
        %v783 = vlaneseq
        %v784 = vshrl.u32 %v783, 7
        %v785 = vsub.s32 1, %v784
        %v786 = vrot.slane %v777, %v785
        %v789 = vmul.f32 %v774, %v782
        %v790 = vmul.f32 %v775, %v786
        %v793 = vrot.slane %v789, 6
        %v794 = vrot.slane %v790, 6
        %797 = vst [vmem:[#allocation4 + $0x10] sm:$0xc] %v793
        %798 = vst [vmem:[#allocation4 + $0x18] sm:$0xc] %v794
        %799 = vrot.lane.b32.xlu0 %v635, 125
        %v800 = vpop.permute.xlu0 %799
        %801 = vrot.lane.b32.xlu0 %v636, 125
        %v802 = vpop.permute.xlu0 %801
        %vm803 = vcmp.lt.s32.totalorder %v642, 125
        %v804 = vsel %vm803, %v800, %v802
        %v805 = vsel %vm803, %v802, %v800
        %s806 = scalar_lea.vmem %s4, 6
        %v807 = vld [vmem:[%s806] ss:$8 sm:$0x3]
        %v809 = vlaneseq
        %v810 = vshrl.u32 %v809, 7
        %v811 = vsub.s32 0, %v810
        %v812 = vrot.slane %v807, %v811
        %v813 = vlaneseq
        %v814 = vshrl.u32 %v813, 7
        %v815 = vsub.s32 1, %v814
        %v816 = vrot.slane %v807, %v815
        %v819 = vmul.f32 %v804, %v812
        %v820 = vmul.f32 %v805, %v816
        %v823 = vrot.slane %v819, 4
        %v824 = vrot.slane %v820, 4
        %827 = vst [vmem:[#allocation4 + $0x10] sm:$0x30] %v823
        %828 = vst [vmem:[#allocation4 + $0x18] sm:$0x30] %v824
        %v829 = vld [vmem:[#allocation4] sm:$0xff]
        %v830 = vld [vmem:[#allocation4 + $0x8] sm:$0xff]
        %v831 = vld [vmem:[#allocation4 + $0x10] sm:$0xff]
        %v832 = vld [vmem:[#allocation4 + $0x18] sm:$0xff]
        %s833 = sld [smem:[#allocation5]]
        %v834 = vstv %s833
        %835 = vrot.lane.b32.xlu0 %v829, 48
        %v836 = vpop.permute.xlu0 %835
        %837 = vrot.lane.b32.xlu0 %v831, 48
        %v838 = vpop.permute.xlu0 %837
        %839 = vrot.lane.b32.xlu0 %v830, 48
        %v840 = vpop.permute.xlu0 %839
        %841 = vrot.lane.b32.xlu0 %v832, 48
        %v842 = vpop.permute.xlu0 %841
        %vm843 = vcmp.lt.s32.totalorder %v642, 48
        %v844 = vsel %vm843, %v836, %v840
        %v845 = vsel %vm843, %v838, %v842
        %v846 = vsel %vm843, %v840, %v836
        %v847 = vsel %vm843, %v842, %v838
        %v848 = vld [vmem:[%s3] sm:$0x1]
        %vm849 = vcmask 130048
        %v851 = vsel %vm849, %v848, 0
        %853 = vmatprep.subr.mxu0 0.0
        %854 = vmatpush1.msra.mxu0 0.0
        %855 = vmatprep.subr.mxu0 0.0
        %856 = vmatpush1.msra.mxu0 0.0
        %857 = vmatprep.subr.mxu0 0.0
        %858 = vmatpush1.msra.mxu0 0.0
        %859 = vmatprep.subr.mxu0 0.0
        %860 = vmatpush1.msra.mxu0 0.0
        %861 = vmatprep.subr.mxu0 0.0
        %862 = vmatpush1.msra.mxu0 0.0
        %863 = vmatprep.subr.mxu0 0.0
        %864 = vmatpush1.msra.mxu0 0.0
        %865 = vmatprep.subr.mxu0 0.0
        %866 = vmatpush1.msra.mxu0 0.0
        %867 = vmatprep.subr.mxu0 0.0
        %868 = vmatpush1.msra.mxu0 0.0
        %869 = vmatprep.subr.mxu0 0.0
        %870 = vmatpush1.msra.mxu0 0.0
        %871 = vmatprep.subr.mxu0 0.0
        %872 = vmatpush1.msra.mxu0 0.0
        %873 = vmatprep.subr.mxu0 0.0
        %874 = vmatpush1.msra.mxu0 0.0
        %875 = vmatprep.subr.mxu0 0.0
        %876 = vmatpush1.msra.mxu0 0.0
        %877 = vmatprep.subr.mxu0 0.0
        %878 = vmatpush1.msra.mxu0 0.0
        %879 = vmatprep.subr.mxu0 0.0
        %880 = vmatpush1.msra.mxu0 0.0
        %881 = vmatprep.subr.mxu0 %v845
        %882 = vmatpush1.msra.mxu0 %v847
        %883 = vmatprep.subr.mxu0 %v844
        %884 = vmatpush1.msra.mxu0 %v846
        %885 = vmatprep.subr.mxu0 0.0
        %886 = vmatpush2.msra.mxu0 0.0
        %887 = vmatprep.subr.mxu0 0.0
        %888 = vmatpush2.msra.mxu0 0.0
        %889 = vmatprep.subr.mxu0 0.0
        %890 = vmatpush2.msra.mxu0 0.0
        %891 = vmatprep.subr.mxu0 0.0
        %892 = vmatpush2.msra.mxu0 0.0
        %893 = vmatprep.subr.mxu0 0.0
        %894 = vmatpush2.msra.mxu0 0.0
        %895 = vmatprep.subr.mxu0 0.0
        %896 = vmatpush2.msra.mxu0 0.0
        %897 = vmatprep.subr.mxu0 0.0
        %898 = vmatpush2.msra.mxu0 0.0
        %899 = vmatprep.subr.mxu0 0.0
        %900 = vmatpush2.msra.mxu0 0.0
        %901 = vmatprep.subr.mxu0 0.0
        %902 = vmatpush2.msra.mxu0 0.0
        %903 = vmatprep.subr.mxu0 0.0
        %904 = vmatpush2.msra.mxu0 0.0
        %905 = vmatprep.subr.mxu0 0.0
        %906 = vmatpush2.msra.mxu0 0.0
        %907 = vmatprep.subr.mxu0 0.0
        %908 = vmatpush2.msra.mxu0 0.0
        %909 = vmatprep.subr.mxu0 0.0
        %910 = vmatpush2.msra.mxu0 0.0
        %911 = vmatprep.subr.mxu0 0.0
        %912 = vmatpush2.msra.mxu0 0.0
        %913 = vmatprep.subr.mxu0 0.0
        %914 = vmatpush2.msra.mxu0 0.0
        %915 = vmatprep.subr.mxu0 0.0
        %916 = vmatpush2.msra.mxu0 0.0
        %917 = vmatprep.mubr.f32.mxu0 0.0
        %918 = vmatmul.mubr.f32.gmra.mxu0 %v851
        %v919 = vpop.f32.mrf.mxu0
        %v920 = vadd.f32 0.0, %v919
        %v921 = vpop.f32.mrf.mxu0
        %v922 = vadd.f32 0.0, %v921
        %923 = vdwg.mxu0
        %v924 = vld [vmem:[%s5] ss:$8 sm:$0x3]
        %v926 = vlaneseq
        %v927 = vshrl.u32 %v926, 7
        %v928 = vsub.s32 0, %v927
        %v929 = vrot.slane %v924, %v928
        %v930 = vlaneseq
        %v931 = vshrl.u32 %v930, 7
        %v932 = vsub.s32 1, %v931
        %v933 = vrot.slane %v924, %v932
        %v936 = vmul.f32 %v920, %v929
        %v937 = vmul.f32 %v922, %v933
        %v938 = vadd.f32 %v834, %v936
        %v939 = vadd.f32 %v834, %v937
        %940 = vrot.lane.b32.xlu0 %v829, 32
        %v941 = vpop.permute.xlu0 %940
        %942 = vrot.lane.b32.xlu0 %v831, 32
        %v943 = vpop.permute.xlu0 %942
        %944 = vrot.lane.b32.xlu0 %v830, 32
        %v945 = vpop.permute.xlu0 %944
        %946 = vrot.lane.b32.xlu0 %v832, 32
        %v947 = vpop.permute.xlu0 %946
        %vm948 = vcmp.lt.s32.totalorder %v642, 32
        %v949 = vsel %vm948, %v941, %v945
        %v950 = vsel %vm948, %v943, %v947
        %v951 = vsel %vm948, %v945, %v941
        %v952 = vsel %vm948, %v947, %v943
        %v953 = vld [vmem:[%s3 + $0x1] sm:$0x1]
        %v955 = vsel %vm849, %v953, 0
        %957 = vmatprep.subr.mxu0 0.0
        %958 = vmatpush1.msra.mxu0 0.0
        %959 = vmatprep.subr.mxu0 0.0
        %960 = vmatpush1.msra.mxu0 0.0
        %961 = vmatprep.subr.mxu0 0.0
        %962 = vmatpush1.msra.mxu0 0.0
        %963 = vmatprep.subr.mxu0 0.0
        %964 = vmatpush1.msra.mxu0 0.0
        %965 = vmatprep.subr.mxu0 0.0
        %966 = vmatpush1.msra.mxu0 0.0
        %967 = vmatprep.subr.mxu0 0.0
        %968 = vmatpush1.msra.mxu0 0.0
        %969 = vmatprep.subr.mxu0 0.0
        %970 = vmatpush1.msra.mxu0 0.0
        %971 = vmatprep.subr.mxu0 0.0
        %972 = vmatpush1.msra.mxu0 0.0
        %973 = vmatprep.subr.mxu0 0.0
        %974 = vmatpush1.msra.mxu0 0.0
        %975 = vmatprep.subr.mxu0 0.0
        %976 = vmatpush1.msra.mxu0 0.0
        %977 = vmatprep.subr.mxu0 0.0
        %978 = vmatpush1.msra.mxu0 0.0
        %979 = vmatprep.subr.mxu0 0.0
        %980 = vmatpush1.msra.mxu0 0.0
        %981 = vmatprep.subr.mxu0 0.0
        %982 = vmatpush1.msra.mxu0 0.0
        %983 = vmatprep.subr.mxu0 0.0
        %984 = vmatpush1.msra.mxu0 0.0
        %985 = vmatprep.subr.mxu0 %v950
        %986 = vmatpush1.msra.mxu0 %v952
        %987 = vmatprep.subr.mxu0 %v949
        %988 = vmatpush1.msra.mxu0 %v951
        %989 = vmatprep.subr.mxu0 0.0
        %990 = vmatpush2.msra.mxu0 0.0
        %991 = vmatprep.subr.mxu0 0.0
        %992 = vmatpush2.msra.mxu0 0.0
        %993 = vmatprep.subr.mxu0 0.0
        %994 = vmatpush2.msra.mxu0 0.0
        %995 = vmatprep.subr.mxu0 0.0
        %996 = vmatpush2.msra.mxu0 0.0
        %997 = vmatprep.subr.mxu0 0.0
        %998 = vmatpush2.msra.mxu0 0.0
        %999 = vmatprep.subr.mxu0 0.0
        %1000 = vmatpush2.msra.mxu0 0.0
        %1001 = vmatprep.subr.mxu0 0.0
        %1002 = vmatpush2.msra.mxu0 0.0
        %1003 = vmatprep.subr.mxu0 0.0
        %1004 = vmatpush2.msra.mxu0 0.0
        %1005 = vmatprep.subr.mxu0 0.0
        %1006 = vmatpush2.msra.mxu0 0.0
        %1007 = vmatprep.subr.mxu0 0.0
        %1008 = vmatpush2.msra.mxu0 0.0
        %1009 = vmatprep.subr.mxu0 0.0
        %1010 = vmatpush2.msra.mxu0 0.0
        %1011 = vmatprep.subr.mxu0 0.0
        %1012 = vmatpush2.msra.mxu0 0.0
        %1013 = vmatprep.subr.mxu0 0.0
        %1014 = vmatpush2.msra.mxu0 0.0
        %1015 = vmatprep.subr.mxu0 0.0
        %1016 = vmatpush2.msra.mxu0 0.0
        %1017 = vmatprep.subr.mxu0 0.0
        %1018 = vmatpush2.msra.mxu0 0.0
        %1019 = vmatprep.subr.mxu0 0.0
        %1020 = vmatpush2.msra.mxu0 0.0
        %1021 = vmatprep.mubr.f32.mxu0 0.0
        %1022 = vmatmul.mubr.f32.gmra.mxu0 %v955
        %v1023 = vpop.f32.mrf.mxu0
        %v1024 = vadd.f32 0.0, %v1023
        %v1025 = vpop.f32.mrf.mxu0
        %v1026 = vadd.f32 0.0, %v1025
        %1027 = vdwg.mxu0
        %s1028 = scalar_lea.vmem %s5, 1
        %v1029 = vld [vmem:[%s1028] ss:$8 sm:$0x3]
        %v1031 = vlaneseq
        %v1032 = vshrl.u32 %v1031, 7
        %v1033 = vsub.s32 0, %v1032
        %v1034 = vrot.slane %v1029, %v1033
        %v1035 = vlaneseq
        %v1036 = vshrl.u32 %v1035, 7
        %v1037 = vsub.s32 1, %v1036
        %v1038 = vrot.slane %v1029, %v1037
        %v1041 = vmul.f32 %v1024, %v1034
        %v1042 = vmul.f32 %v1026, %v1038
        %v1043 = vadd.f32 %v938, %v1041
        %v1044 = vadd.f32 %v939, %v1042
        %1045 = vrot.lane.b32.xlu0 %v829, 16
        %v1046 = vpop.permute.xlu0 %1045
        %1047 = vrot.lane.b32.xlu0 %v831, 16
        %v1048 = vpop.permute.xlu0 %1047
        %1049 = vrot.lane.b32.xlu0 %v830, 16
        %v1050 = vpop.permute.xlu0 %1049
        %1051 = vrot.lane.b32.xlu0 %v832, 16
        %v1052 = vpop.permute.xlu0 %1051
        %vm1053 = vcmp.lt.s32.totalorder %v642, 16
        %v1054 = vsel %vm1053, %v1046, %v1050
        %v1055 = vsel %vm1053, %v1048, %v1052
        %v1056 = vsel %vm1053, %v1050, %v1046
        %v1057 = vsel %vm1053, %v1052, %v1048
        %v1058 = vld [vmem:[%s3 + $0x2] sm:$0x1]
        %v1060 = vsel %vm849, %v1058, 0
        %1062 = vmatprep.subr.mxu0 0.0
        %1063 = vmatpush1.msra.mxu0 0.0
        %1064 = vmatprep.subr.mxu0 0.0
        %1065 = vmatpush1.msra.mxu0 0.0
        %1066 = vmatprep.subr.mxu0 0.0
        %1067 = vmatpush1.msra.mxu0 0.0
        %1068 = vmatprep.subr.mxu0 0.0
        %1069 = vmatpush1.msra.mxu0 0.0
        %1070 = vmatprep.subr.mxu0 0.0
        %1071 = vmatpush1.msra.mxu0 0.0
        %1072 = vmatprep.subr.mxu0 0.0
        %1073 = vmatpush1.msra.mxu0 0.0
        %1074 = vmatprep.subr.mxu0 0.0
        %1075 = vmatpush1.msra.mxu0 0.0
        %1076 = vmatprep.subr.mxu0 0.0
        %1077 = vmatpush1.msra.mxu0 0.0
        %1078 = vmatprep.subr.mxu0 0.0
        %1079 = vmatpush1.msra.mxu0 0.0
        %1080 = vmatprep.subr.mxu0 0.0
        %1081 = vmatpush1.msra.mxu0 0.0
        %1082 = vmatprep.subr.mxu0 0.0
        %1083 = vmatpush1.msra.mxu0 0.0
        %1084 = vmatprep.subr.mxu0 0.0
        %1085 = vmatpush1.msra.mxu0 0.0
        %1086 = vmatprep.subr.mxu0 0.0
        %1087 = vmatpush1.msra.mxu0 0.0
        %1088 = vmatprep.subr.mxu0 0.0
        %1089 = vmatpush1.msra.mxu0 0.0
        %1090 = vmatprep.subr.mxu0 %v1055
        %1091 = vmatpush1.msra.mxu0 %v1057
        %1092 = vmatprep.subr.mxu0 %v1054
        %1093 = vmatpush1.msra.mxu0 %v1056
        %1094 = vmatprep.subr.mxu0 0.0
        %1095 = vmatpush2.msra.mxu0 0.0
        %1096 = vmatprep.subr.mxu0 0.0
        %1097 = vmatpush2.msra.mxu0 0.0
        %1098 = vmatprep.subr.mxu0 0.0
        %1099 = vmatpush2.msra.mxu0 0.0
        %1100 = vmatprep.subr.mxu0 0.0
        %1101 = vmatpush2.msra.mxu0 0.0
        %1102 = vmatprep.subr.mxu0 0.0
        %1103 = vmatpush2.msra.mxu0 0.0
        %1104 = vmatprep.subr.mxu0 0.0
        %1105 = vmatpush2.msra.mxu0 0.0
        %1106 = vmatprep.subr.mxu0 0.0
        %1107 = vmatpush2.msra.mxu0 0.0
        %1108 = vmatprep.subr.mxu0 0.0
        %1109 = vmatpush2.msra.mxu0 0.0
        %1110 = vmatprep.subr.mxu0 0.0
        %1111 = vmatpush2.msra.mxu0 0.0
        %1112 = vmatprep.subr.mxu0 0.0
        %1113 = vmatpush2.msra.mxu0 0.0
        %1114 = vmatprep.subr.mxu0 0.0
        %1115 = vmatpush2.msra.mxu0 0.0
        %1116 = vmatprep.subr.mxu0 0.0
        %1117 = vmatpush2.msra.mxu0 0.0
        %1118 = vmatprep.subr.mxu0 0.0
        %1119 = vmatpush2.msra.mxu0 0.0
        %1120 = vmatprep.subr.mxu0 0.0
        %1121 = vmatpush2.msra.mxu0 0.0
        %1122 = vmatprep.subr.mxu0 0.0
        %1123 = vmatpush2.msra.mxu0 0.0
        %1124 = vmatprep.subr.mxu0 0.0
        %1125 = vmatpush2.msra.mxu0 0.0
        %1126 = vmatprep.mubr.f32.mxu0 0.0
        %1127 = vmatmul.mubr.f32.gmra.mxu0 %v1060
        %v1128 = vpop.f32.mrf.mxu0
        %v1129 = vadd.f32 0.0, %v1128
        %v1130 = vpop.f32.mrf.mxu0
        %v1131 = vadd.f32 0.0, %v1130
        %1132 = vdwg.mxu0
        %s1133 = scalar_lea.vmem %s5, 2
        %v1134 = vld [vmem:[%s1133] ss:$8 sm:$0x3]
        %v1136 = vlaneseq
        %v1137 = vshrl.u32 %v1136, 7
        %v1138 = vsub.s32 0, %v1137
        %v1139 = vrot.slane %v1134, %v1138
        %v1140 = vlaneseq
        %v1141 = vshrl.u32 %v1140, 7
        %v1142 = vsub.s32 1, %v1141
        %v1143 = vrot.slane %v1134, %v1142
        %v1146 = vmul.f32 %v1129, %v1139
        %v1147 = vmul.f32 %v1131, %v1143
        %v1148 = vadd.f32 %v1043, %v1146
        %v1149 = vadd.f32 %v1044, %v1147
        %v1150 = vld [vmem:[%s3 + $0x3] sm:$0x1]
        %v1152 = vsel %vm849, %v1150, 0
        %1154 = vmatprep.subr.mxu0 0.0
        %1155 = vmatpush1.msra.mxu0 0.0
        %1156 = vmatprep.subr.mxu0 0.0
        %1157 = vmatpush1.msra.mxu0 0.0
        %1158 = vmatprep.subr.mxu0 0.0
        %1159 = vmatpush1.msra.mxu0 0.0
        %1160 = vmatprep.subr.mxu0 0.0
        %1161 = vmatpush1.msra.mxu0 0.0
        %1162 = vmatprep.subr.mxu0 0.0
        %1163 = vmatpush1.msra.mxu0 0.0
        %1164 = vmatprep.subr.mxu0 0.0
        %1165 = vmatpush1.msra.mxu0 0.0
        %1166 = vmatprep.subr.mxu0 0.0
        %1167 = vmatpush1.msra.mxu0 0.0
        %1168 = vmatprep.subr.mxu0 0.0
        %1169 = vmatpush1.msra.mxu0 0.0
        %1170 = vmatprep.subr.mxu0 0.0
        %1171 = vmatpush1.msra.mxu0 0.0
        %1172 = vmatprep.subr.mxu0 0.0
        %1173 = vmatpush1.msra.mxu0 0.0
        %1174 = vmatprep.subr.mxu0 0.0
        %1175 = vmatpush1.msra.mxu0 0.0
        %1176 = vmatprep.subr.mxu0 0.0
        %1177 = vmatpush1.msra.mxu0 0.0
        %1178 = vmatprep.subr.mxu0 0.0
        %1179 = vmatpush1.msra.mxu0 0.0
        %1180 = vmatprep.subr.mxu0 0.0
        %1181 = vmatpush1.msra.mxu0 0.0
        %1182 = vmatprep.subr.mxu0 %v832
        %1183 = vmatpush1.msra.mxu0 %v831
        %1184 = vmatprep.subr.mxu0 %v830
        %1185 = vmatpush1.msra.mxu0 %v829
        %1186 = vmatprep.subr.mxu0 0.0
        %1187 = vmatpush2.msra.mxu0 0.0
        %1188 = vmatprep.subr.mxu0 0.0
        %1189 = vmatpush2.msra.mxu0 0.0
        %1190 = vmatprep.subr.mxu0 0.0
        %1191 = vmatpush2.msra.mxu0 0.0
        %1192 = vmatprep.subr.mxu0 0.0
        %1193 = vmatpush2.msra.mxu0 0.0
        %1194 = vmatprep.subr.mxu0 0.0
        %1195 = vmatpush2.msra.mxu0 0.0
        %1196 = vmatprep.subr.mxu0 0.0
        %1197 = vmatpush2.msra.mxu0 0.0
        %1198 = vmatprep.subr.mxu0 0.0
        %1199 = vmatpush2.msra.mxu0 0.0
        %1200 = vmatprep.subr.mxu0 0.0
        %1201 = vmatpush2.msra.mxu0 0.0
        %1202 = vmatprep.subr.mxu0 0.0
        %1203 = vmatpush2.msra.mxu0 0.0
        %1204 = vmatprep.subr.mxu0 0.0
        %1205 = vmatpush2.msra.mxu0 0.0
        %1206 = vmatprep.subr.mxu0 0.0
        %1207 = vmatpush2.msra.mxu0 0.0
        %1208 = vmatprep.subr.mxu0 0.0
        %1209 = vmatpush2.msra.mxu0 0.0
        %1210 = vmatprep.subr.mxu0 0.0
        %1211 = vmatpush2.msra.mxu0 0.0
        %1212 = vmatprep.subr.mxu0 0.0
        %1213 = vmatpush2.msra.mxu0 0.0
        %1214 = vmatprep.subr.mxu0 0.0
        %1215 = vmatpush2.msra.mxu0 0.0
        %1216 = vmatprep.subr.mxu0 0.0
        %1217 = vmatpush2.msra.mxu0 0.0
        %1218 = vmatprep.mubr.f32.mxu0 0.0
        %1219 = vmatmul.mubr.f32.gmra.mxu0 %v1152
        %v1220 = vpop.f32.mrf.mxu0
        %v1221 = vadd.f32 0.0, %v1220
        %v1222 = vpop.f32.mrf.mxu0
        %v1223 = vadd.f32 0.0, %v1222
        %1224 = vdwg.mxu0
        %s1225 = scalar_lea.vmem %s5, 3
        %v1226 = vld [vmem:[%s1225] ss:$8 sm:$0x3]
        %v1228 = vlaneseq
        %v1229 = vshrl.u32 %v1228, 7
        %v1230 = vsub.s32 0, %v1229
        %v1231 = vrot.slane %v1226, %v1230
        %v1232 = vlaneseq
        %v1233 = vshrl.u32 %v1232, 7
        %v1234 = vsub.s32 1, %v1233
        %v1235 = vrot.slane %v1226, %v1234
        %v1238 = vmul.f32 %v1221, %v1231
        %v1239 = vmul.f32 %v1223, %v1235
        %v1240 = vadd.f32 %v1148, %v1238
        %v1241 = vadd.f32 %v1149, %v1239
        %1242 = vrot.lane.b32.xlu0 %v829, 112
        %v1243 = vpop.permute.xlu0 %1242
        %1244 = vrot.lane.b32.xlu0 %v831, 112
        %v1245 = vpop.permute.xlu0 %1244
        %1246 = vrot.lane.b32.xlu0 %v830, 112
        %v1247 = vpop.permute.xlu0 %1246
        %1248 = vrot.lane.b32.xlu0 %v832, 112
        %v1249 = vpop.permute.xlu0 %1248
        %vm1250 = vcmp.lt.s32.totalorder %v642, 112
        %v1251 = vsel %vm1250, %v1243, %v1247
        %v1252 = vsel %vm1250, %v1245, %v1249
        %v1253 = vsel %vm1250, %v1247, %v1243
        %v1254 = vsel %vm1250, %v1249, %v1245
        %v1255 = vld [vmem:[%s3 + $0x4] sm:$0x1]
        %v1257 = vsel %vm849, %v1255, 0
        %1259 = vmatprep.subr.mxu0 0.0
        %1260 = vmatpush1.msra.mxu0 0.0
        %1261 = vmatprep.subr.mxu0 0.0
        %1262 = vmatpush1.msra.mxu0 0.0
        %1263 = vmatprep.subr.mxu0 0.0
        %1264 = vmatpush1.msra.mxu0 0.0
        %1265 = vmatprep.subr.mxu0 0.0
        %1266 = vmatpush1.msra.mxu0 0.0
        %1267 = vmatprep.subr.mxu0 0.0
        %1268 = vmatpush1.msra.mxu0 0.0
        %1269 = vmatprep.subr.mxu0 0.0
        %1270 = vmatpush1.msra.mxu0 0.0
        %1271 = vmatprep.subr.mxu0 0.0
        %1272 = vmatpush1.msra.mxu0 0.0
        %1273 = vmatprep.subr.mxu0 0.0
        %1274 = vmatpush1.msra.mxu0 0.0
        %1275 = vmatprep.subr.mxu0 0.0
        %1276 = vmatpush1.msra.mxu0 0.0
        %1277 = vmatprep.subr.mxu0 0.0
        %1278 = vmatpush1.msra.mxu0 0.0
        %1279 = vmatprep.subr.mxu0 0.0
        %1280 = vmatpush1.msra.mxu0 0.0
        %1281 = vmatprep.subr.mxu0 0.0
        %1282 = vmatpush1.msra.mxu0 0.0
        %1283 = vmatprep.subr.mxu0 0.0
        %1284 = vmatpush1.msra.mxu0 0.0
        %1285 = vmatprep.subr.mxu0 0.0
        %1286 = vmatpush1.msra.mxu0 0.0
        %1287 = vmatprep.subr.mxu0 %v1254
        %1288 = vmatpush1.msra.mxu0 %v1252
        %1289 = vmatprep.subr.mxu0 %v1253
        %1290 = vmatpush1.msra.mxu0 %v1251
        %1291 = vmatprep.subr.mxu0 0.0
        %1292 = vmatpush2.msra.mxu0 0.0
        %1293 = vmatprep.subr.mxu0 0.0
        %1294 = vmatpush2.msra.mxu0 0.0
        %1295 = vmatprep.subr.mxu0 0.0
        %1296 = vmatpush2.msra.mxu0 0.0
        %1297 = vmatprep.subr.mxu0 0.0
        %1298 = vmatpush2.msra.mxu0 0.0
        %1299 = vmatprep.subr.mxu0 0.0
        %1300 = vmatpush2.msra.mxu0 0.0
        %1301 = vmatprep.subr.mxu0 0.0
        %1302 = vmatpush2.msra.mxu0 0.0
        %1303 = vmatprep.subr.mxu0 0.0
        %1304 = vmatpush2.msra.mxu0 0.0
        %1305 = vmatprep.subr.mxu0 0.0
        %1306 = vmatpush2.msra.mxu0 0.0
        %1307 = vmatprep.subr.mxu0 0.0
        %1308 = vmatpush2.msra.mxu0 0.0
        %1309 = vmatprep.subr.mxu0 0.0
        %1310 = vmatpush2.msra.mxu0 0.0
        %1311 = vmatprep.subr.mxu0 0.0
        %1312 = vmatpush2.msra.mxu0 0.0
        %1313 = vmatprep.subr.mxu0 0.0
        %1314 = vmatpush2.msra.mxu0 0.0
        %1315 = vmatprep.subr.mxu0 0.0
        %1316 = vmatpush2.msra.mxu0 0.0
        %1317 = vmatprep.subr.mxu0 0.0
        %1318 = vmatpush2.msra.mxu0 0.0
        %1319 = vmatprep.subr.mxu0 0.0
        %1320 = vmatpush2.msra.mxu0 0.0
        %1321 = vmatprep.subr.mxu0 0.0
        %1322 = vmatpush2.msra.mxu0 0.0
        %1323 = vmatprep.mubr.f32.mxu0 0.0
        %1324 = vmatmul.mubr.f32.gmra.mxu0 %v1257
        %v1325 = vpop.f32.mrf.mxu0
        %v1326 = vadd.f32 0.0, %v1325
        %v1327 = vpop.f32.mrf.mxu0
        %v1328 = vadd.f32 0.0, %v1327
        %1329 = vdwg.mxu0
        %s1330 = scalar_lea.vmem %s5, 4
        %v1331 = vld [vmem:[%s1330] ss:$8 sm:$0x3]
        %v1333 = vlaneseq
        %v1334 = vshrl.u32 %v1333, 7
        %v1335 = vsub.s32 0, %v1334
        %v1336 = vrot.slane %v1331, %v1335
        %v1337 = vlaneseq
        %v1338 = vshrl.u32 %v1337, 7
        %v1339 = vsub.s32 1, %v1338
        %v1340 = vrot.slane %v1331, %v1339
        %v1343 = vmul.f32 %v1326, %v1336
        %v1344 = vmul.f32 %v1328, %v1340
        %v1345 = vadd.f32 %v1240, %v1343
        %v1346 = vadd.f32 %v1241, %v1344
        %1347 = vrot.lane.b32.xlu0 %v829, 96
        %v1348 = vpop.permute.xlu0 %1347
        %1349 = vrot.lane.b32.xlu0 %v831, 96
        %v1350 = vpop.permute.xlu0 %1349
        %1351 = vrot.lane.b32.xlu0 %v830, 96
        %v1352 = vpop.permute.xlu0 %1351
        %1353 = vrot.lane.b32.xlu0 %v832, 96
        %v1354 = vpop.permute.xlu0 %1353
        %vm1355 = vcmp.lt.s32.totalorder %v642, 96
        %v1356 = vsel %vm1355, %v1348, %v1352
        %v1357 = vsel %vm1355, %v1350, %v1354
        %v1358 = vsel %vm1355, %v1352, %v1348
        %v1359 = vsel %vm1355, %v1354, %v1350
        %v1360 = vld [vmem:[%s3 + $0x5] sm:$0x1]
        %v1362 = vsel %vm849, %v1360, 0
        %1364 = vmatprep.subr.mxu0 0.0
        %1365 = vmatpush1.msra.mxu0 0.0
        %1366 = vmatprep.subr.mxu0 0.0
        %1367 = vmatpush1.msra.mxu0 0.0
        %1368 = vmatprep.subr.mxu0 0.0
        %1369 = vmatpush1.msra.mxu0 0.0
        %1370 = vmatprep.subr.mxu0 0.0
        %1371 = vmatpush1.msra.mxu0 0.0
        %1372 = vmatprep.subr.mxu0 0.0
        %1373 = vmatpush1.msra.mxu0 0.0
        %1374 = vmatprep.subr.mxu0 0.0
        %1375 = vmatpush1.msra.mxu0 0.0
        %1376 = vmatprep.subr.mxu0 0.0
        %1377 = vmatpush1.msra.mxu0 0.0
        %1378 = vmatprep.subr.mxu0 0.0
        %1379 = vmatpush1.msra.mxu0 0.0
        %1380 = vmatprep.subr.mxu0 0.0
        %1381 = vmatpush1.msra.mxu0 0.0
        %1382 = vmatprep.subr.mxu0 0.0
        %1383 = vmatpush1.msra.mxu0 0.0
        %1384 = vmatprep.subr.mxu0 0.0
        %1385 = vmatpush1.msra.mxu0 0.0
        %1386 = vmatprep.subr.mxu0 0.0
        %1387 = vmatpush1.msra.mxu0 0.0
        %1388 = vmatprep.subr.mxu0 0.0
        %1389 = vmatpush1.msra.mxu0 0.0
        %1390 = vmatprep.subr.mxu0 0.0
        %1391 = vmatpush1.msra.mxu0 0.0
        %1392 = vmatprep.subr.mxu0 %v1359
        %1393 = vmatpush1.msra.mxu0 %v1357
        %1394 = vmatprep.subr.mxu0 %v1358
        %1395 = vmatpush1.msra.mxu0 %v1356
        %1396 = vmatprep.subr.mxu0 0.0
        %1397 = vmatpush2.msra.mxu0 0.0
        %1398 = vmatprep.subr.mxu0 0.0
        %1399 = vmatpush2.msra.mxu0 0.0
        %1400 = vmatprep.subr.mxu0 0.0
        %1401 = vmatpush2.msra.mxu0 0.0
        %1402 = vmatprep.subr.mxu0 0.0
        %1403 = vmatpush2.msra.mxu0 0.0
        %1404 = vmatprep.subr.mxu0 0.0
        %1405 = vmatpush2.msra.mxu0 0.0
        %1406 = vmatprep.subr.mxu0 0.0
        %1407 = vmatpush2.msra.mxu0 0.0
        %1408 = vmatprep.subr.mxu0 0.0
        %1409 = vmatpush2.msra.mxu0 0.0
        %1410 = vmatprep.subr.mxu0 0.0
        %1411 = vmatpush2.msra.mxu0 0.0
        %1412 = vmatprep.subr.mxu0 0.0
        %1413 = vmatpush2.msra.mxu0 0.0
        %1414 = vmatprep.subr.mxu0 0.0
        %1415 = vmatpush2.msra.mxu0 0.0
        %1416 = vmatprep.subr.mxu0 0.0
        %1417 = vmatpush2.msra.mxu0 0.0
        %1418 = vmatprep.subr.mxu0 0.0
        %1419 = vmatpush2.msra.mxu0 0.0
        %1420 = vmatprep.subr.mxu0 0.0
        %1421 = vmatpush2.msra.mxu0 0.0
        %1422 = vmatprep.subr.mxu0 0.0
        %1423 = vmatpush2.msra.mxu0 0.0
        %1424 = vmatprep.subr.mxu0 0.0
        %1425 = vmatpush2.msra.mxu0 0.0
        %1426 = vmatprep.subr.mxu0 0.0
        %1427 = vmatpush2.msra.mxu0 0.0
        %1428 = vmatprep.mubr.f32.mxu0 0.0
        %1429 = vmatmul.mubr.f32.gmra.mxu0 %v1362
        %v1430 = vpop.f32.mrf.mxu0
        %v1431 = vadd.f32 0.0, %v1430
        %v1432 = vpop.f32.mrf.mxu0
        %v1433 = vadd.f32 0.0, %v1432
        %1434 = vdwg.mxu0
        %s1435 = scalar_lea.vmem %s5, 5
        %v1436 = vld [vmem:[%s1435] ss:$8 sm:$0x3]
        %v1438 = vlaneseq
        %v1439 = vshrl.u32 %v1438, 7
        %v1440 = vsub.s32 0, %v1439
        %v1441 = vrot.slane %v1436, %v1440
        %v1442 = vlaneseq
        %v1443 = vshrl.u32 %v1442, 7
        %v1444 = vsub.s32 1, %v1443
        %v1445 = vrot.slane %v1436, %v1444
        %v1448 = vmul.f32 %v1431, %v1441
        %v1449 = vmul.f32 %v1433, %v1445
        %v1450 = vadd.f32 %v1345, %v1448
        %v1451 = vadd.f32 %v1346, %v1449
        %1452 = vrot.lane.b32.xlu0 %v829, 80
        %v1453 = vpop.permute.xlu0 %1452
        %1454 = vrot.lane.b32.xlu0 %v831, 80
        %v1455 = vpop.permute.xlu0 %1454
        %1456 = vrot.lane.b32.xlu0 %v830, 80
        %v1457 = vpop.permute.xlu0 %1456
        %1458 = vrot.lane.b32.xlu0 %v832, 80
        %v1459 = vpop.permute.xlu0 %1458
        %vm1460 = vcmp.lt.s32.totalorder %v642, 80
        %v1461 = vsel %vm1460, %v1453, %v1457
        %v1462 = vsel %vm1460, %v1455, %v1459
        %v1463 = vsel %vm1460, %v1457, %v1453
        %v1464 = vsel %vm1460, %v1459, %v1455
        %v1465 = vld [vmem:[%s3 + $0x6] sm:$0x1]
        %v1467 = vsel %vm849, %v1465, 0
        %1469 = vmatprep.subr.mxu0 0.0
        %1470 = vmatpush1.msra.mxu0 0.0
        %1471 = vmatprep.subr.mxu0 0.0
        %1472 = vmatpush1.msra.mxu0 0.0
        %1473 = vmatprep.subr.mxu0 0.0
        %1474 = vmatpush1.msra.mxu0 0.0
        %1475 = vmatprep.subr.mxu0 0.0
        %1476 = vmatpush1.msra.mxu0 0.0
        %1477 = vmatprep.subr.mxu0 0.0
        %1478 = vmatpush1.msra.mxu0 0.0
        %1479 = vmatprep.subr.mxu0 0.0
        %1480 = vmatpush1.msra.mxu0 0.0
        %1481 = vmatprep.subr.mxu0 0.0
        %1482 = vmatpush1.msra.mxu0 0.0
        %1483 = vmatprep.subr.mxu0 0.0
        %1484 = vmatpush1.msra.mxu0 0.0
        %1485 = vmatprep.subr.mxu0 0.0
        %1486 = vmatpush1.msra.mxu0 0.0
        %1487 = vmatprep.subr.mxu0 0.0
        %1488 = vmatpush1.msra.mxu0 0.0
        %1489 = vmatprep.subr.mxu0 0.0
        %1490 = vmatpush1.msra.mxu0 0.0
        %1491 = vmatprep.subr.mxu0 0.0
        %1492 = vmatpush1.msra.mxu0 0.0
        %1493 = vmatprep.subr.mxu0 0.0
        %1494 = vmatpush1.msra.mxu0 0.0
        %1495 = vmatprep.subr.mxu0 0.0
        %1496 = vmatpush1.msra.mxu0 0.0
        %1497 = vmatprep.subr.mxu0 %v1464
        %1498 = vmatpush1.msra.mxu0 %v1462
        %1499 = vmatprep.subr.mxu0 %v1463
        %1500 = vmatpush1.msra.mxu0 %v1461
        %1501 = vmatprep.subr.mxu0 0.0
        %1502 = vmatpush2.msra.mxu0 0.0
        %1503 = vmatprep.subr.mxu0 0.0
        %1504 = vmatpush2.msra.mxu0 0.0
        %1505 = vmatprep.subr.mxu0 0.0
        %1506 = vmatpush2.msra.mxu0 0.0
        %1507 = vmatprep.subr.mxu0 0.0
        %1508 = vmatpush2.msra.mxu0 0.0
        %1509 = vmatprep.subr.mxu0 0.0
        %1510 = vmatpush2.msra.mxu0 0.0
        %1511 = vmatprep.subr.mxu0 0.0
        %1512 = vmatpush2.msra.mxu0 0.0
        %1513 = vmatprep.subr.mxu0 0.0
        %1514 = vmatpush2.msra.mxu0 0.0
        %1515 = vmatprep.subr.mxu0 0.0
        %1516 = vmatpush2.msra.mxu0 0.0
        %1517 = vmatprep.subr.mxu0 0.0
        %1518 = vmatpush2.msra.mxu0 0.0
        %1519 = vmatprep.subr.mxu0 0.0
        %1520 = vmatpush2.msra.mxu0 0.0
        %1521 = vmatprep.subr.mxu0 0.0
        %1522 = vmatpush2.msra.mxu0 0.0
        %1523 = vmatprep.subr.mxu0 0.0
        %1524 = vmatpush2.msra.mxu0 0.0
        %1525 = vmatprep.subr.mxu0 0.0
        %1526 = vmatpush2.msra.mxu0 0.0
        %1527 = vmatprep.subr.mxu0 0.0
        %1528 = vmatpush2.msra.mxu0 0.0
        %1529 = vmatprep.subr.mxu0 0.0
        %1530 = vmatpush2.msra.mxu0 0.0
        %1531 = vmatprep.subr.mxu0 0.0
        %1532 = vmatpush2.msra.mxu0 0.0
        %1533 = vmatprep.mubr.f32.mxu0 0.0
        %1534 = vmatmul.mubr.f32.gmra.mxu0 %v1467
        %v1535 = vpop.f32.mrf.mxu0
        %v1536 = vadd.f32 0.0, %v1535
        %v1537 = vpop.f32.mrf.mxu0
        %v1538 = vadd.f32 0.0, %v1537
        %1539 = vdwg.mxu0
        %s1540 = scalar_lea.vmem %s5, 6
        %v1541 = vld [vmem:[%s1540] ss:$8 sm:$0x3]
        %v1543 = vlaneseq
        %v1544 = vshrl.u32 %v1543, 7
        %v1545 = vsub.s32 0, %v1544
        %v1546 = vrot.slane %v1541, %v1545
        %v1547 = vlaneseq
        %v1548 = vshrl.u32 %v1547, 7
        %v1549 = vsub.s32 1, %v1548
        %v1550 = vrot.slane %v1541, %v1549
        %v1553 = vmul.f32 %v1536, %v1546
        %v1554 = vmul.f32 %v1538, %v1550
        %v1555 = vadd.f32 %v1450, %v1553
        %v1556 = vadd.f32 %v1451, %v1554
        %v1557 = vxor.u32 %v1555, 2147483648
        %v1558 = vxor.u32 %v1556, 2147483648
        %v1559 = vmul.f32 %v1557, 1.442695
        %v1560 = vpow.pop %v1559
        %v1561 = vmul.f32 %v1558, 1.442695
        %v1562 = vpow.pop %v1561
        %v1563 = vadd.f32 %v1560, 1.0
        %v1564 = vadd.f32 %v1562, 1.0
        %v1565 = vrcp.pop %v1563
        %v1566 = vmul.f32 1.0, %v1565
        %v1567 = vrcp.pop %v1564
        %v1568 = vmul.f32 1.0, %v1567
        %v1569 = vld [vmem:[%s304] sm:$0xff]
        %v1570 = vld [vmem:[%s304 + $0x8] sm:$0xff]
        %v1571 = vld [vmem:[#allocation2] sm:$0xff]
        %1573 = vset.pattern.permute.xlu0 0
        %1574 = vperm.xlu0 %1573, %v1571
        %v1575 = vpop.permute.xlu0 %1574
        %v1577 = vmul.f32 %v1569, %v1575
        %v1578 = vmul.f32 %v1570, %v1575
        %v1579 = vlaneseq
        %v1580 = vshrl.u32 %v1579, 7
        %v1581 = vsub.s32 0, %v1580
        %v1582 = vrot.slane %v1566, %v1581
        %v1583 = vlaneseq
        %v1584 = vshrl.u32 %v1583, 7
        %v1585 = vsub.s32 0, %v1584
        %v1586 = vrot.slane %v1568, %v1585
        %v1587 = vmul.f32 %v1577, %v1582
        %v1588 = vmul.f32 %v1578, %v1586
        %s1589 = smul.addr %s302, 8
        %s1590 = scalar_lea.vmem %s297, %s1589 [#allocation9]
        %1591 = vst [vmem:[%s1590] sm:$0xff] %v1587
        %1592 = vst [vmem:[%s1590 + $0x8] sm:$0xff] %v1588
        %v1593 = vld [vmem:[%s324] sm:$0xff]
        %v1594 = vld [vmem:[%s324 + $0x8] sm:$0xff]
        %v1595 = vld [vmem:[%s408] sm:$0xff]
        %1597 = vset.pattern.permute.xlu0 0
        %1598 = vperm.xlu0 %1597, %v1595
        %v1599 = vpop.permute.xlu0 %1598
        %v1601 = vmul.f32 %v1593, %v1599
        %v1602 = vmul.f32 %v1594, %v1599
        %v1603 = vmul.f32 %v1601, %v1582
        %v1604 = vmul.f32 %v1602, %v1586
        %s1605 = smul.addr %s322, 8
        %s1606 = scalar_lea.vmem %s297, %s1605 [#allocation9]
        %1607 = vst [vmem:[%s1606] sm:$0xff] %v1603
        %1608 = vst [vmem:[%s1606 + $0x8] sm:$0xff] %v1604
        %v1609 = vld [vmem:[%s344] sm:$0xff]
        %v1610 = vld [vmem:[%s344 + $0x8] sm:$0xff]
        %v1611 = vld [vmem:[%s422] sm:$0xff]
        %1613 = vset.pattern.permute.xlu0 0
        %1614 = vperm.xlu0 %1613, %v1611
        %v1615 = vpop.permute.xlu0 %1614
        %v1617 = vmul.f32 %v1609, %v1615
        %v1618 = vmul.f32 %v1610, %v1615
        %v1619 = vmul.f32 %v1617, %v1582
        %v1620 = vmul.f32 %v1618, %v1586
        %s1621 = smul.addr %s342, 8
        %s1622 = scalar_lea.vmem %s297, %s1621 [#allocation9]
        %1623 = vst [vmem:[%s1622] sm:$0xff] %v1619
        %1624 = vst [vmem:[%s1622 + $0x8] sm:$0xff] %v1620
        %v1625 = vld [vmem:[%s364] sm:$0xff]
        %v1626 = vld [vmem:[%s364 + $0x8] sm:$0xff]
        %v1627 = vld [vmem:[%s436] sm:$0xff]
        %1629 = vset.pattern.permute.xlu0 0
        %1630 = vperm.xlu0 %1629, %v1627
        %v1631 = vpop.permute.xlu0 %1630
        %v1633 = vmul.f32 %v1625, %v1631
        %v1634 = vmul.f32 %v1626, %v1631
        %v1635 = vmul.f32 %v1633, %v1582
        %v1636 = vmul.f32 %v1634, %v1586
        %s1637 = smul.addr %s362, 8
        %s1638 = scalar_lea.vmem %s297, %s1637 [#allocation9]
        %1639 = vst [vmem:[%s1638] sm:$0xff] %v1635
        %1640 = vst [vmem:[%s1638 + $0x8] sm:$0xff] %v1636
        %s1641 = sand.u32 %s185, 1
        %s1642 = scalar_lea.sflag [#allocation8], %s1641
        %s1643 = sand.u32 %s185, 1
        %s1644 = smul.addr %s1643, 64
        %s1645 = scalar_lea.vmem [#allocation9], %s1644
        // Predicated region
        $region53: #{tpu_custom_call.1} parent=47 // pred_check
          %p1646 = pneg %p195
        $region54: #{tpu_custom_call.1} parent=47 // pred_check_branch
          %1648 = sbr.rel (%p1646) target = $region56
        $region55: #{tpu_custom_call.1} parent=47 // pred_region
          %s1650 = ssub.s32 1024, 1024
          %1651 = vsyncadd %s1642, %s1650
          %s1652 = smul.addr %s25, 8
          %s1653 = smul.addr %s1652, 128
          %s1654 = scalar_lea.hbm %s7, %s1653
          %s1655 = sshll.u32 %s1645, 4
          %s1656 = int_to_ptr.vmem [resolvable:$true] %s1655
          %1661 = dma.vmem_to_hbm [thread:$0]  %s1656, 1024, %s1654, %s1642, 256, 256, 16
        $region56: #{tpu_custom_call.1} parent=47 // pred_fallthru
          _
      $region48: #{tpu_custom_call.1} parent=5 // pred_fallthru
        _
      %p1662 = scmp.le.s32.totalorder 2, %s20
      // Predicated region
      $region57: #{tpu_custom_call.1} parent=5 // pred_check
        %p1663 = pneg %p1662
      $region58: #{tpu_custom_call.1} parent=5 // pred_check_branch
        %1665 = sbr.rel (%p1663) target = $region60
      $region59: #{tpu_custom_call.1} parent=5 // pred_region
        %s1666 = ssub.s32 %s20, 2
        // Predicated region
        $region61: #{tpu_custom_call.1} parent=59 // pred_check
          %p1667 = pneg %p201
        $region62: #{tpu_custom_call.1} parent=59 // pred_check_branch
          %1669 = sbr.rel (%p1667) target = $region64
        $region63: #{tpu_custom_call.1} parent=59 // pred_region
          %s1670 = sand.u32 %s186, 1
          %s1671 = scalar_lea.sflag [#allocation8], %s1670
          %s1672 = sand.u32 %s186, 1
          %s1673 = smul.addr %s1672, 64
          %s1674 = scalar_lea.vmem [#allocation9], %s1673
          %1675 = dma.done %s1671, 1024
        $region64: #{tpu_custom_call.1} parent=59 // pred_fallthru
          _
      $region60: #{tpu_custom_call.1} parent=5 // pred_fallthru
        _
    $region6: #{tpu_custom_call.1} parent=1 // loop_footer
      %s24 = sadd.s32 1, %s20
    $region7: #{tpu_custom_call.1} parent=1 // loop_footer_branch
      %19 = sbr.rel target = $region3
    $region8: #{tpu_custom_call.1} parent=1 // loop_exit
      _
    %1676 = vsyncpa [#allocation7], 1
    %s1677 = scalar_lea.sflag [#allocation7], 1
    %1678 = vsyncpa %s1677, 1
    %1679 = vsyncpa [#allocation8], 1
    %s1680 = scalar_lea.sflag [#allocation8], 1
    %1681 = vsyncpa %s1680, 1

</llo_original>
